<compile_context>
chip_gen: v5e
topology: v5e:2x2
jax: 0.10.0
libtpu: 0.0.40
codegen_flags: <defaults>
</compile_context>

<pallas_src>
import math
from functools import partial

import jax
import jax.numpy as jnp
import numpy as np
from jax.experimental import pallas as pl
from jax.experimental.pallas import tpu as pltpu


# -------------------- fused GRU + linear + attention kernel --------------------
def make_fused_kernel(num_layers, seq, batch, hidden):
    H = hidden

    def kernel(*refs):
        it = iter(refs)
        x_ref = next(it)                 # (seq*batch, input_size); row t*batch+b == x[b, t]
        h0_ref = next(it)                # (num_layers, batch, H)
        gru = [tuple(next(it) for _ in range(4)) for _ in range(num_layers)]
        wl_ref = next(it)                # (num_layers, H, H)  == per-layer split of Linear(L*H, H)
        bl_ref = next(it)                # (1, H)
        wqkv_ref = next(it)              # (H, 3H)  columns [q | k | v]
        bqkv_ref = next(it)              # (1, 3H)
        wo_ref = next(it)                # (H, H)
        bo_ref = next(it)                # (1, H)
        out_ref = next(it)               # (batch, H)
        hseq_buf = next(it)              # VMEM scratch (seq*batch, H): layer l -> layer l+1

        def mm(a, b):
            return jnp.dot(a, b, preferred_element_type=jnp.float32)

        hn = []
        for l in range(num_layers):
            wih_ref, whh_ref, bih_ref, bhh_ref = gru[l]
            layer_in = x_ref[...] if l == 0 else hseq_buf[...]
            # Hoisted input projection for ALL timesteps: one wide matmul,
            # b_ih folded here (off the serial critical path).
            gx_all = mm(layer_in, wih_ref[...]) + bih_ref[...]       # (seq*batch, 3H)
            whh = whh_ref[...]
            bhh = bhh_ref[...]
            h = h0_ref[l]                                            # (batch, H)
            for t in range(seq):                                     # static unroll (seq small)
                gx = gx_all[t * batch:(t + 1) * batch, :]            # (batch, 3H) static slice
                gh = mm(h, whh) + bhh                                # (batch, 3H)
                # PyTorch GRU gate order: r, z, n ; n = tanh(gx_n + r*(W_hn h + b_hn))
                r = jax.nn.sigmoid(gx[:, 0:H] + gh[:, 0:H])
                z = jax.nn.sigmoid(gx[:, H:2 * H] + gh[:, H:2 * H])
                n = jnp.tanh(gx[:, 2 * H:3 * H] + r * gh[:, 2 * H:3 * H])
                h = (1.0 - z) * n + z * h
                if l + 1 < num_layers:
                    hseq_buf[t * batch:(t + 1) * batch, :] = h
            hn.append(h)                                             # final hidden of layer l

        # self.linear applied to hn.permute(1,0,2).reshape(B, L*H):
        # concat avoided by summing per-layer partial products.
        h1 = bl_ref[...]
        for l in range(num_layers):
            h1 = h1 + mm(hn[l], wl_ref[l])                           # (batch, H)

        # Self_Attention (h=1 head), eval mode.
        qkv = mm(h1, wqkv_ref[...]) + bqkv_ref[...]                  # (batch, 3H)
        q = qkv[:, 0:H]
        k = qkv[:, H:2 * H]
        v = qkv[:, 2 * H:3 * H]
        att = mm(k.T, q) * (1.0 / math.sqrt(H))                      # (H, H)
        att = att - jnp.max(att, axis=-1, keepdims=True)             # stable softmax
        att = jnp.exp(att)
        att = att / jnp.sum(att, axis=-1, keepdims=True)             # exact divide
        # TODO(synk): nn.Dropout(0.1) is identity in eval mode; not applied.
        out = mm(v, att)                                             # (batch, H)
        out_ref[...] = mm(out, wo_ref[...]) + bo_ref[...]

    return kernel


@partial(jax.jit, static_argnames=())
def energy_encoder_net_forward(x, h0, params):
    batch, seq, input_size = x.shape
    num_layers = len(params["gru"])
    H = params["bl"].shape[-1]

    # Time-major, flattened so that row t*batch + b corresponds to x[b, t].
    x_flat = jnp.transpose(x, (1, 0, 2)).reshape(seq * batch, input_size)
    x_flat = x_flat.astype(jnp.float32)

    args = [x_flat, h0.astype(jnp.float32)]
    for lp in params["gru"]:
        args += [lp["wih"], lp["whh"], lp["bih"], lp["bhh"]]
    args += [params["wl"], params["bl"], params["wqkv"], params["bqkv"],
             params["wo"], params["bo"]]

    out = pl.pallas_call(
        make_fused_kernel(num_layers, seq, batch, H),
        out_shape=jax.ShapeDtypeStruct((batch, H), jnp.float32),
        scratch_shapes=[pltpu.VMEM((seq * batch, H), jnp.float32)],
    )(*args)
    return out.reshape(batch, 1, H)


# -------------------- pure-JAX reference --------------------
def ref_forward(x, h0, params):
    batch, seq, _ = x.shape
    H = params["bl"].shape[-1]
    inp = jnp.transpose(x, (1, 0, 2))            # (seq, batch, in)
    hn = []
    for l, lp in enumerate(params["gru"]):
        h = h0[l]
        outs = []
        for t in range(seq):
            xt = inp[t]
            gx = xt @ lp["wih"] + lp["bih"]
            gh = h @ lp["whh"] + lp["bhh"]
            r = jax.nn.sigmoid(gx[:, :H] + gh[:, :H])
            z = jax.nn.sigmoid(gx[:, H:2 * H] + gh[:, H:2 * H])
            n = jnp.tanh(gx[:, 2 * H:] + r * gh[:, 2 * H:])
            h = (1.0 - z) * n + z * h
            outs.append(h)
        inp = jnp.stack(outs)
        hn.append(h)
    h1 = params["bl"]
    for l in range(len(hn)):
        h1 = h1 + hn[l] @ params["wl"][l]
    qkv = h1 @ params["wqkv"] + params["bqkv"]
    q, k, v = qkv[:, :H], qkv[:, H:2 * H], qkv[:, 2 * H:]
    att = jax.nn.softmax((k.T @ q) / math.sqrt(H), axis=-1)
    out = (v @ att) @ params["wo"] + params["bo"]
    return out.reshape(batch, 1, H)


# -------------------- deterministic param init (fused layouts) --------------------
def init_params(key, input_size, hidden, num_layers):
    stdv = 1.0 / math.sqrt(hidden)
    keys = iter(jax.random.split(key, 64))

    def u(shape):
        return jax.random.uniform(next(keys), shape, jnp.float32, -stdv, stdv)

    params = {"gru": []}
    for l in range(num_layers):
        in_dim = input_size if l == 0 else hidden
        params["gru"].append(dict(
            wih=u((in_dim, 3 * hidden)),    # columns ordered [r | z | n]
            whh=u((hidden, 3 * hidden)),
            bih=u((1, 3 * hidden)),
            bhh=u((1, 3 * hidden)),
        ))
    params["wl"] = u((num_layers, hidden, hidden))   # per-layer split of (L*H, H)
    params["bl"] = u((1, hidden))
    params["wqkv"] = u((hidden, 3 * hidden))         # columns ordered [q | k | v]
    params["bqkv"] = u((1, 3 * hidden))
    params["wo"] = u((hidden, hidden))
    params["bo"] = u((1, hidden))
    return params


if __name__ == "__main__":
    batch, seq, input_size, hidden, num_layers = 2, 8, 4, 32, 2

    key = jax.random.PRNGKey(0)
    kx, kh, kp = jax.random.split(key, 3)
    x = jax.random.normal(kx, (batch, seq, input_size), jnp.float32)   # batch_first
    h0 = jax.random.normal(kh, (num_layers, batch, hidden), jnp.float32)
    params = init_params(kp, input_size, hidden, num_layers)

    out = jax.block_until_ready(energy_encoder_net_forward(x, h0, params))
    assert out.shape == (batch, 1, hidden)

    ref = jax.block_until_ready(ref_forward(x, h0, params))
    np.testing.assert_allclose(np.asarray(out), np.asarray(ref),
                               rtol=1e-4, atol=1e-4)
    print("KERNEL_OK")
</pallas_src>

<mosaic_0001>
module attributes {stable_mosaic.version = 11 : i64} {
  func.func @kernel(%arg0: memref<16x4xf32, #tpu.memory_space<vmem>>, %arg1: memref<2x2x32xf32, #tpu.memory_space<vmem>>, %arg2: memref<4x96xf32, #tpu.memory_space<vmem>>, %arg3: memref<32x96xf32, #tpu.memory_space<vmem>>, %arg4: memref<1x96xf32, #tpu.memory_space<vmem>>, %arg5: memref<1x96xf32, #tpu.memory_space<vmem>>, %arg6: memref<32x96xf32, #tpu.memory_space<vmem>>, %arg7: memref<32x96xf32, #tpu.memory_space<vmem>>, %arg8: memref<1x96xf32, #tpu.memory_space<vmem>>, %arg9: memref<1x96xf32, #tpu.memory_space<vmem>>, %arg10: memref<2x32x32xf32, #tpu.memory_space<vmem>>, %arg11: memref<1x32xf32, #tpu.memory_space<vmem>>, %arg12: memref<32x96xf32, #tpu.memory_space<vmem>>, %arg13: memref<1x96xf32, #tpu.memory_space<vmem>>, %arg14: memref<32x32xf32, #tpu.memory_space<vmem>>, %arg15: memref<1x32xf32, #tpu.memory_space<vmem>>, %arg16: memref<2x32xf32, #tpu.memory_space<vmem>>, %arg17: memref<16x32xf32, #tpu.memory_space<vmem>>) attributes {dimension_semantics = [], scalar_prefetch = 0 : i64, scratch_operands = 1 : i64, tpu.core_type = #tpu.core_type<tc>} {
    %c0 = arith.constant 0 : index
    %c0_0 = arith.constant 0 : index
    %0 = vector.load %arg0[%c0, %c0_0] : memref<16x4xf32, #tpu.memory_space<vmem>>, vector<16x4xf32>
    %c0_1 = arith.constant 0 : index
    %c0_2 = arith.constant 0 : index
    %1 = vector.load %arg2[%c0_1, %c0_2] : memref<4x96xf32, #tpu.memory_space<vmem>>, vector<4x96xf32>
    %cst = arith.constant dense<0.000000e+00> : vector<16x96xf32>
    %2 = tpu.matmul %0, %1, %cst {dimension_numbers = #tpu.dot_dimension_numbers<[1], [0], [0], [1], [0, 0, 1, 1], [], []>} : vector<16x4xf32>, vector<4x96xf32>, vector<16x96xf32> -> vector<16x96xf32>
    %c0_3 = arith.constant 0 : index
    %c0_4 = arith.constant 0 : index
    %3 = vector.load %arg4[%c0_3, %c0_4] : memref<1x96xf32, #tpu.memory_space<vmem>>, vector<1x96xf32>
    %4 = vector.broadcast %3 : vector<1x96xf32> to vector<16x96xf32>
    %5 = arith.addf %2, %4 : vector<16x96xf32>
    %c0_5 = arith.constant 0 : index
    %c0_6 = arith.constant 0 : index
    %6 = vector.load %arg3[%c0_5, %c0_6] : memref<32x96xf32, #tpu.memory_space<vmem>>, vector<32x96xf32>
    %c0_7 = arith.constant 0 : index
    %c0_8 = arith.constant 0 : index
    %7 = vector.load %arg5[%c0_7, %c0_8] : memref<1x96xf32, #tpu.memory_space<vmem>>, vector<1x96xf32>
    %c0_9 = arith.constant 0 : index
    %c0_10 = arith.constant 0 : index
    %c0_11 = arith.constant 0 : index
    %8 = vector.load %arg1[%c0_9, %c0_10, %c0_11] : memref<2x2x32xf32, #tpu.memory_space<vmem>>, vector<1x2x32xf32>
    %9 = vector.shape_cast %8 : vector<1x2x32xf32> to vector<2x32xf32>
    %10 = vector.extract_strided_slice %5 {offsets = [0, 0], sizes = [2, 96], strides = [1, 1]} : vector<16x96xf32> to vector<2x96xf32>
    %cst_12 = arith.constant dense<0.000000e+00> : vector<2x96xf32>
    %11 = tpu.matmul %9, %6, %cst_12 {dimension_numbers = #tpu.dot_dimension_numbers<[1], [0], [0], [1], [0, 0, 1, 1], [], []>} : vector<2x32xf32>, vector<32x96xf32>, vector<2x96xf32> -> vector<2x96xf32>
    %12 = vector.broadcast %7 : vector<1x96xf32> to vector<2x96xf32>
    %13 = arith.addf %11, %12 : vector<2x96xf32>
    %14 = vector.extract_strided_slice %10 {offsets = [0, 0], sizes = [2, 32], strides = [1, 1]} : vector<2x96xf32> to vector<2x32xf32>
    %15 = vector.extract_strided_slice %13 {offsets = [0, 0], sizes = [2, 32], strides = [1, 1]} : vector<2x96xf32> to vector<2x32xf32>
    %16 = arith.addf %14, %15 : vector<2x32xf32>
    %17 = arith.negf %16 : vector<2x32xf32>
    %18 = math.exp %17 : vector<2x32xf32>
    %cst_13 = arith.constant 1.000000e+00 : f32
    %19 = vector.broadcast %cst_13 : f32 to vector<2x32xf32>
    %20 = arith.addf %19, %18 : vector<2x32xf32>
    %21 = arith.divf %19, %20 : vector<2x32xf32>
    %22 = vector.extract_strided_slice %10 {offsets = [0, 32], sizes = [2, 32], strides = [1, 1]} : vector<2x96xf32> to vector<2x32xf32>
    %23 = vector.extract_strided_slice %13 {offsets = [0, 32], sizes = [2, 32], strides = [1, 1]} : vector<2x96xf32> to vector<2x32xf32>
    %24 = arith.addf %22, %23 : vector<2x32xf32>
    %25 = arith.negf %24 : vector<2x32xf32>
    %26 = math.exp %25 : vector<2x32xf32>
    %cst_14 = arith.constant 1.000000e+00 : f32
    %27 = vector.broadcast %cst_14 : f32 to vector<2x32xf32>
    %28 = arith.addf %27, %26 : vector<2x32xf32>
    %29 = arith.divf %27, %28 : vector<2x32xf32>
    %30 = vector.extract_strided_slice %10 {offsets = [0, 64], sizes = [2, 32], strides = [1, 1]} : vector<2x96xf32> to vector<2x32xf32>
    %31 = vector.extract_strided_slice %13 {offsets = [0, 64], sizes = [2, 32], strides = [1, 1]} : vector<2x96xf32> to vector<2x32xf32>
    %32 = arith.mulf %21, %31 : vector<2x32xf32>
    %33 = arith.addf %30, %32 : vector<2x32xf32>
    %34 = math.tanh %33 : vector<2x32xf32>
    %cst_15 = arith.constant 1.000000e+00 : f32
    %35 = vector.broadcast %cst_15 : f32 to vector<2x32xf32>
    %36 = arith.subf %35, %29 : vector<2x32xf32>
    %37 = arith.mulf %36, %34 : vector<2x32xf32>
    %38 = arith.mulf %29, %9 : vector<2x32xf32>
    %39 = arith.addf %37, %38 : vector<2x32xf32>
    %c0_16 = arith.constant 0 : index
    %c0_17 = arith.constant 0 : index
    %40 = vector.load %arg17[%c0_16, %c0_17] : memref<16x32xf32, #tpu.memory_space<vmem>>, vector<2x32xf32>
    tpu.vector_store %arg17[%c0_16, %c0_17], %39 {strides = array<i32>} : memref<16x32xf32, #tpu.memory_space<vmem>>, vector<2x32xf32>,
    %41 = vector.extract_strided_slice %5 {offsets = [2, 0], sizes = [2, 96], strides = [1, 1]} : vector<16x96xf32> to vector<2x96xf32>
    %cst_18 = arith.constant dense<0.000000e+00> : vector<2x96xf32>
    %42 = tpu.matmul %39, %6, %cst_18 {dimension_numbers = #tpu.dot_dimension_numbers<[1], [0], [0], [1], [0, 0, 1, 1], [], []>} : vector<2x32xf32>, vector<32x96xf32>, vector<2x96xf32> -> vector<2x96xf32>
    %43 = vector.broadcast %7 : vector<1x96xf32> to vector<2x96xf32>
    %44 = arith.addf %42, %43 : vector<2x96xf32>
    %45 = vector.extract_strided_slice %41 {offsets = [0, 0], sizes = [2, 32], strides = [1, 1]} : vector<2x96xf32> to vector<2x32xf32>
    %46 = vector.extract_strided_slice %44 {offsets = [0, 0], sizes = [2, 32], strides = [1, 1]} : vector<2x96xf32> to vector<2x32xf32>
    %47 = arith.addf %45, %46 : vector<2x32xf32>
    %48 = arith.negf %47 : vector<2x32xf32>
    %49 = math.exp %48 : vector<2x32xf32>
    %cst_19 = arith.constant 1.000000e+00 : f32
    %50 = vector.broadcast %cst_19 : f32 to vector<2x32xf32>
    %51 = arith.addf %50, %49 : vector<2x32xf32>
    %52 = arith.divf %50, %51 : vector<2x32xf32>
    %53 = vector.extract_strided_slice %41 {offsets = [0, 32], sizes = [2, 32], strides = [1, 1]} : vector<2x96xf32> to vector<2x32xf32>
    %54 = vector.extract_strided_slice %44 {offsets = [0, 32], sizes = [2, 32], strides = [1, 1]} : vector<2x96xf32> to vector<2x32xf32>
    %55 = arith.addf %53, %54 : vector<2x32xf32>
    %56 = arith.negf %55 : vector<2x32xf32>
    %57 = math.exp %56 : vector<2x32xf32>
    %cst_20 = arith.constant 1.000000e+00 : f32
    %58 = vector.broadcast %cst_20 : f32 to vector<2x32xf32>
    %59 = arith.addf %58, %57 : vector<2x32xf32>
    %60 = arith.divf %58, %59 : vector<2x32xf32>
    %61 = vector.extract_strided_slice %41 {offsets = [0, 64], sizes = [2, 32], strides = [1, 1]} : vector<2x96xf32> to vector<2x32xf32>
    %62 = vector.extract_strided_slice %44 {offsets = [0, 64], sizes = [2, 32], strides = [1, 1]} : vector<2x96xf32> to vector<2x32xf32>
    %63 = arith.mulf %52, %62 : vector<2x32xf32>
    %64 = arith.addf %61, %63 : vector<2x32xf32>
    %65 = math.tanh %64 : vector<2x32xf32>
    %cst_21 = arith.constant 1.000000e+00 : f32
    %66 = vector.broadcast %cst_21 : f32 to vector<2x32xf32>
    %67 = arith.subf %66, %60 : vector<2x32xf32>
    %68 = arith.mulf %67, %65 : vector<2x32xf32>
    %69 = arith.mulf %60, %39 : vector<2x32xf32>
    %70 = arith.addf %68, %69 : vector<2x32xf32>
    %c2 = arith.constant 2 : index
    %c0_22 = arith.constant 0 : index
    %71 = vector.load %arg17[%c2, %c0_22] : memref<16x32xf32, #tpu.memory_space<vmem>>, vector<2x32xf32>
    tpu.vector_store %arg17[%c2, %c0_22], %70 {strides = array<i32>} : memref<16x32xf32, #tpu.memory_space<vmem>>, vector<2x32xf32>,
    %72 = vector.extract_strided_slice %5 {offsets = [4, 0], sizes = [2, 96], strides = [1, 1]} : vector<16x96xf32> to vector<2x96xf32>
    %cst_23 = arith.constant dense<0.000000e+00> : vector<2x96xf32>
    %73 = tpu.matmul %70, %6, %cst_23 {dimension_numbers = #tpu.dot_dimension_numbers<[1], [0], [0], [1], [0, 0, 1, 1], [], []>} : vector<2x32xf32>, vector<32x96xf32>, vector<2x96xf32> -> vector<2x96xf32>
    %74 = vector.broadcast %7 : vector<1x96xf32> to vector<2x96xf32>
    %75 = arith.addf %73, %74 : vector<2x96xf32>
    %76 = vector.extract_strided_slice %72 {offsets = [0, 0], sizes = [2, 32], strides = [1, 1]} : vector<2x96xf32> to vector<2x32xf32>
    %77 = vector.extract_strided_slice %75 {offsets = [0, 0], sizes = [2, 32], strides = [1, 1]} : vector<2x96xf32> to vector<2x32xf32>
    %78 = arith.addf %76, %77 : vector<2x32xf32>
    %79 = arith.negf %78 : vector<2x32xf32>
    %80 = math.exp %79 : vector<2x32xf32>
    %cst_24 = arith.constant 1.000000e+00 : f32
    %81 = vector.broadcast %cst_24 : f32 to vector<2x32xf32>
    %82 = arith.addf %81, %80 : vector<2x32xf32>
    %83 = arith.divf %81, %82 : vector<2x32xf32>
    %84 = vector.extract_strided_slice %72 {offsets = [0, 32], sizes = [2, 32], strides = [1, 1]} : vector<2x96xf32> to vector<2x32xf32>
    %85 = vector.extract_strided_slice %75 {offsets = [0, 32], sizes = [2, 32], strides = [1, 1]} : vector<2x96xf32> to vector<2x32xf32>
    %86 = arith.addf %84, %85 : vector<2x32xf32>
    %87 = arith.negf %86 : vector<2x32xf32>
    %88 = math.exp %87 : vector<2x32xf32>
    %cst_25 = arith.constant 1.000000e+00 : f32
    %89 = vector.broadcast %cst_25 : f32 to vector<2x32xf32>
    %90 = arith.addf %89, %88 : vector<2x32xf32>
    %91 = arith.divf %89, %90 : vector<2x32xf32>
    %92 = vector.extract_strided_slice %72 {offsets = [0, 64], sizes = [2, 32], strides = [1, 1]} : vector<2x96xf32> to vector<2x32xf32>
    %93 = vector.extract_strided_slice %75 {offsets = [0, 64], sizes = [2, 32], strides = [1, 1]} : vector<2x96xf32> to vector<2x32xf32>
    %94 = arith.mulf %83, %93 : vector<2x32xf32>
    %95 = arith.addf %92, %94 : vector<2x32xf32>
    %96 = math.tanh %95 : vector<2x32xf32>
    %cst_26 = arith.constant 1.000000e+00 : f32
    %97 = vector.broadcast %cst_26 : f32 to vector<2x32xf32>
    %98 = arith.subf %97, %91 : vector<2x32xf32>
    %99 = arith.mulf %98, %96 : vector<2x32xf32>
    %100 = arith.mulf %91, %70 : vector<2x32xf32>
    %101 = arith.addf %99, %100 : vector<2x32xf32>
    %c4 = arith.constant 4 : index
    %c0_27 = arith.constant 0 : index
    %102 = vector.load %arg17[%c4, %c0_27] : memref<16x32xf32, #tpu.memory_space<vmem>>, vector<2x32xf32>
    tpu.vector_store %arg17[%c4, %c0_27], %101 {strides = array<i32>} : memref<16x32xf32, #tpu.memory_space<vmem>>, vector<2x32xf32>,
    %103 = vector.extract_strided_slice %5 {offsets = [6, 0], sizes = [2, 96], strides = [1, 1]} : vector<16x96xf32> to vector<2x96xf32>
    %cst_28 = arith.constant dense<0.000000e+00> : vector<2x96xf32>
    %104 = tpu.matmul %101, %6, %cst_28 {dimension_numbers = #tpu.dot_dimension_numbers<[1], [0], [0], [1], [0, 0, 1, 1], [], []>} : vector<2x32xf32>, vector<32x96xf32>, vector<2x96xf32> -> vector<2x96xf32>
    %105 = vector.broadcast %7 : vector<1x96xf32> to vector<2x96xf32>
    %106 = arith.addf %104, %105 : vector<2x96xf32>
    %107 = vector.extract_strided_slice %103 {offsets = [0, 0], sizes = [2, 32], strides = [1, 1]} : vector<2x96xf32> to vector<2x32xf32>
    %108 = vector.extract_strided_slice %106 {offsets = [0, 0], sizes = [2, 32], strides = [1, 1]} : vector<2x96xf32> to vector<2x32xf32>
    %109 = arith.addf %107, %108 : vector<2x32xf32>
    %110 = arith.negf %109 : vector<2x32xf32>
    %111 = math.exp %110 : vector<2x32xf32>
    %cst_29 = arith.constant 1.000000e+00 : f32
    %112 = vector.broadcast %cst_29 : f32 to vector<2x32xf32>
    %113 = arith.addf %112, %111 : vector<2x32xf32>
    %114 = arith.divf %112, %113 : vector<2x32xf32>
    %115 = vector.extract_strided_slice %103 {offsets = [0, 32], sizes = [2, 32], strides = [1, 1]} : vector<2x96xf32> to vector<2x32xf32>
    %116 = vector.extract_strided_slice %106 {offsets = [0, 32], sizes = [2, 32], strides = [1, 1]} : vector<2x96xf32> to vector<2x32xf32>
    %117 = arith.addf %115, %116 : vector<2x32xf32>
    %118 = arith.negf %117 : vector<2x32xf32>
    %119 = math.exp %118 : vector<2x32xf32>
    %cst_30 = arith.constant 1.000000e+00 : f32
    %120 = vector.broadcast %cst_30 : f32 to vector<2x32xf32>
    %121 = arith.addf %120, %119 : vector<2x32xf32>
    %122 = arith.divf %120, %121 : vector<2x32xf32>
    %123 = vector.extract_strided_slice %103 {offsets = [0, 64], sizes = [2, 32], strides = [1, 1]} : vector<2x96xf32> to vector<2x32xf32>
    %124 = vector.extract_strided_slice %106 {offsets = [0, 64], sizes = [2, 32], strides = [1, 1]} : vector<2x96xf32> to vector<2x32xf32>
    %125 = arith.mulf %114, %124 : vector<2x32xf32>
    %126 = arith.addf %123, %125 : vector<2x32xf32>
    %127 = math.tanh %126 : vector<2x32xf32>
    %cst_31 = arith.constant 1.000000e+00 : f32
    %128 = vector.broadcast %cst_31 : f32 to vector<2x32xf32>
    %129 = arith.subf %128, %122 : vector<2x32xf32>
    %130 = arith.mulf %129, %127 : vector<2x32xf32>
    %131 = arith.mulf %122, %101 : vector<2x32xf32>
    %132 = arith.addf %130, %131 : vector<2x32xf32>
    %c6 = arith.constant 6 : index
    %c0_32 = arith.constant 0 : index
    %133 = vector.load %arg17[%c6, %c0_32] : memref<16x32xf32, #tpu.memory_space<vmem>>, vector<2x32xf32>
    tpu.vector_store %arg17[%c6, %c0_32], %132 {strides = array<i32>} : memref<16x32xf32, #tpu.memory_space<vmem>>, vector<2x32xf32>,
    %134 = vector.extract_strided_slice %5 {offsets = [8, 0], sizes = [2, 96], strides = [1, 1]} : vector<16x96xf32> to vector<2x96xf32>
    %cst_33 = arith.constant dense<0.000000e+00> : vector<2x96xf32>
    %135 = tpu.matmul %132, %6, %cst_33 {dimension_numbers = #tpu.dot_dimension_numbers<[1], [0], [0], [1], [0, 0, 1, 1], [], []>} : vector<2x32xf32>, vector<32x96xf32>, vector<2x96xf32> -> vector<2x96xf32>
    %136 = vector.broadcast %7 : vector<1x96xf32> to vector<2x96xf32>
    %137 = arith.addf %135, %136 : vector<2x96xf32>
    %138 = vector.extract_strided_slice %134 {offsets = [0, 0], sizes = [2, 32], strides = [1, 1]} : vector<2x96xf32> to vector<2x32xf32>
    %139 = vector.extract_strided_slice %137 {offsets = [0, 0], sizes = [2, 32], strides = [1, 1]} : vector<2x96xf32> to vector<2x32xf32>
    %140 = arith.addf %138, %139 : vector<2x32xf32>
    %141 = arith.negf %140 : vector<2x32xf32>
    %142 = math.exp %141 : vector<2x32xf32>
    %cst_34 = arith.constant 1.000000e+00 : f32
    %143 = vector.broadcast %cst_34 : f32 to vector<2x32xf32>
    %144 = arith.addf %143, %142 : vector<2x32xf32>
    %145 = arith.divf %143, %144 : vector<2x32xf32>
    %146 = vector.extract_strided_slice %134 {offsets = [0, 32], sizes = [2, 32], strides = [1, 1]} : vector<2x96xf32> to vector<2x32xf32>
    %147 = vector.extract_strided_slice %137 {offsets = [0, 32], sizes = [2, 32], strides = [1, 1]} : vector<2x96xf32> to vector<2x32xf32>
    %148 = arith.addf %146, %147 : vector<2x32xf32>
    %149 = arith.negf %148 : vector<2x32xf32>
    %150 = math.exp %149 : vector<2x32xf32>
    %cst_35 = arith.constant 1.000000e+00 : f32
    %151 = vector.broadcast %cst_35 : f32 to vector<2x32xf32>
    %152 = arith.addf %151, %150 : vector<2x32xf32>
    %153 = arith.divf %151, %152 : vector<2x32xf32>
    %154 = vector.extract_strided_slice %134 {offsets = [0, 64], sizes = [2, 32], strides = [1, 1]} : vector<2x96xf32> to vector<2x32xf32>
    %155 = vector.extract_strided_slice %137 {offsets = [0, 64], sizes = [2, 32], strides = [1, 1]} : vector<2x96xf32> to vector<2x32xf32>
    %156 = arith.mulf %145, %155 : vector<2x32xf32>
    %157 = arith.addf %154, %156 : vector<2x32xf32>
    %158 = math.tanh %157 : vector<2x32xf32>
    %cst_36 = arith.constant 1.000000e+00 : f32
    %159 = vector.broadcast %cst_36 : f32 to vector<2x32xf32>
    %160 = arith.subf %159, %153 : vector<2x32xf32>
    %161 = arith.mulf %160, %158 : vector<2x32xf32>
    %162 = arith.mulf %153, %132 : vector<2x32xf32>
    %163 = arith.addf %161, %162 : vector<2x32xf32>
    %c8 = arith.constant 8 : index
    %c0_37 = arith.constant 0 : index
    %164 = vector.load %arg17[%c8, %c0_37] : memref<16x32xf32, #tpu.memory_space<vmem>>, vector<2x32xf32>
    tpu.vector_store %arg17[%c8, %c0_37], %163 {strides = array<i32>} : memref<16x32xf32, #tpu.memory_space<vmem>>, vector<2x32xf32>,
    %165 = vector.extract_strided_slice %5 {offsets = [10, 0], sizes = [2, 96], strides = [1, 1]} : vector<16x96xf32> to vector<2x96xf32>
    %cst_38 = arith.constant dense<0.000000e+00> : vector<2x96xf32>
    %166 = tpu.matmul %163, %6, %cst_38 {dimension_numbers = #tpu.dot_dimension_numbers<[1], [0], [0], [1], [0, 0, 1, 1], [], []>} : vector<2x32xf32>, vector<32x96xf32>, vector<2x96xf32> -> vector<2x96xf32>
    %167 = vector.broadcast %7 : vector<1x96xf32> to vector<2x96xf32>
    %168 = arith.addf %166, %167 : vector<2x96xf32>
    %169 = vector.extract_strided_slice %165 {offsets = [0, 0], sizes = [2, 32], strides = [1, 1]} : vector<2x96xf32> to vector<2x32xf32>
    %170 = vector.extract_strided_slice %168 {offsets = [0, 0], sizes = [2, 32], strides = [1, 1]} : vector<2x96xf32> to vector<2x32xf32>
    %171 = arith.addf %169, %170 : vector<2x32xf32>
    %172 = arith.negf %171 : vector<2x32xf32>
    %173 = math.exp %172 : vector<2x32xf32>
    %cst_39 = arith.constant 1.000000e+00 : f32
    %174 = vector.broadcast %cst_39 : f32 to vector<2x32xf32>
    %175 = arith.addf %174, %173 : vector<2x32xf32>
    %176 = arith.divf %174, %175 : vector<2x32xf32>
    %177 = vector.extract_strided_slice %165 {offsets = [0, 32], sizes = [2, 32], strides = [1, 1]} : vector<2x96xf32> to vector<2x32xf32>
    %178 = vector.extract_strided_slice %168 {offsets = [0, 32], sizes = [2, 32], strides = [1, 1]} : vector<2x96xf32> to vector<2x32xf32>
    %179 = arith.addf %177, %178 : vector<2x32xf32>
    %180 = arith.negf %179 : vector<2x32xf32>
    %181 = math.exp %180 : vector<2x32xf32>
    %cst_40 = arith.constant 1.000000e+00 : f32
    %182 = vector.broadcast %cst_40 : f32 to vector<2x32xf32>
    %183 = arith.addf %182, %181 : vector<2x32xf32>
    %184 = arith.divf %182, %183 : vector<2x32xf32>
    %185 = vector.extract_strided_slice %165 {offsets = [0, 64], sizes = [2, 32], strides = [1, 1]} : vector<2x96xf32> to vector<2x32xf32>
    %186 = vector.extract_strided_slice %168 {offsets = [0, 64], sizes = [2, 32], strides = [1, 1]} : vector<2x96xf32> to vector<2x32xf32>
    %187 = arith.mulf %176, %186 : vector<2x32xf32>
    %188 = arith.addf %185, %187 : vector<2x32xf32>
    %189 = math.tanh %188 : vector<2x32xf32>
    %cst_41 = arith.constant 1.000000e+00 : f32
    %190 = vector.broadcast %cst_41 : f32 to vector<2x32xf32>
    %191 = arith.subf %190, %184 : vector<2x32xf32>
    %192 = arith.mulf %191, %189 : vector<2x32xf32>
    %193 = arith.mulf %184, %163 : vector<2x32xf32>
    %194 = arith.addf %192, %193 : vector<2x32xf32>
    %c10 = arith.constant 10 : index
    %c0_42 = arith.constant 0 : index
    %195 = vector.load %arg17[%c10, %c0_42] : memref<16x32xf32, #tpu.memory_space<vmem>>, vector<2x32xf32>
    tpu.vector_store %arg17[%c10, %c0_42], %194 {strides = array<i32>} : memref<16x32xf32, #tpu.memory_space<vmem>>, vector<2x32xf32>,
    %196 = vector.extract_strided_slice %5 {offsets = [12, 0], sizes = [2, 96], strides = [1, 1]} : vector<16x96xf32> to vector<2x96xf32>
    %cst_43 = arith.constant dense<0.000000e+00> : vector<2x96xf32>
    %197 = tpu.matmul %194, %6, %cst_43 {dimension_numbers = #tpu.dot_dimension_numbers<[1], [0], [0], [1], [0, 0, 1, 1], [], []>} : vector<2x32xf32>, vector<32x96xf32>, vector<2x96xf32> -> vector<2x96xf32>
    %198 = vector.broadcast %7 : vector<1x96xf32> to vector<2x96xf32>
    %199 = arith.addf %197, %198 : vector<2x96xf32>
    %200 = vector.extract_strided_slice %196 {offsets = [0, 0], sizes = [2, 32], strides = [1, 1]} : vector<2x96xf32> to vector<2x32xf32>
    %201 = vector.extract_strided_slice %199 {offsets = [0, 0], sizes = [2, 32], strides = [1, 1]} : vector<2x96xf32> to vector<2x32xf32>
    %202 = arith.addf %200, %201 : vector<2x32xf32>
    %203 = arith.negf %202 : vector<2x32xf32>
    %204 = math.exp %203 : vector<2x32xf32>
    %cst_44 = arith.constant 1.000000e+00 : f32
    %205 = vector.broadcast %cst_44 : f32 to vector<2x32xf32>
    %206 = arith.addf %205, %204 : vector<2x32xf32>
    %207 = arith.divf %205, %206 : vector<2x32xf32>
    %208 = vector.extract_strided_slice %196 {offsets = [0, 32], sizes = [2, 32], strides = [1, 1]} : vector<2x96xf32> to vector<2x32xf32>
    %209 = vector.extract_strided_slice %199 {offsets = [0, 32], sizes = [2, 32], strides = [1, 1]} : vector<2x96xf32> to vector<2x32xf32>
    %210 = arith.addf %208, %209 : vector<2x32xf32>
    %211 = arith.negf %210 : vector<2x32xf32>
    %212 = math.exp %211 : vector<2x32xf32>
    %cst_45 = arith.constant 1.000000e+00 : f32
    %213 = vector.broadcast %cst_45 : f32 to vector<2x32xf32>
    %214 = arith.addf %213, %212 : vector<2x32xf32>
    %215 = arith.divf %213, %214 : vector<2x32xf32>
    %216 = vector.extract_strided_slice %196 {offsets = [0, 64], sizes = [2, 32], strides = [1, 1]} : vector<2x96xf32> to vector<2x32xf32>
    %217 = vector.extract_strided_slice %199 {offsets = [0, 64], sizes = [2, 32], strides = [1, 1]} : vector<2x96xf32> to vector<2x32xf32>
    %218 = arith.mulf %207, %217 : vector<2x32xf32>
    %219 = arith.addf %216, %218 : vector<2x32xf32>
    %220 = math.tanh %219 : vector<2x32xf32>
    %cst_46 = arith.constant 1.000000e+00 : f32
    %221 = vector.broadcast %cst_46 : f32 to vector<2x32xf32>
    %222 = arith.subf %221, %215 : vector<2x32xf32>
    %223 = arith.mulf %222, %220 : vector<2x32xf32>
    %224 = arith.mulf %215, %194 : vector<2x32xf32>
    %225 = arith.addf %223, %224 : vector<2x32xf32>
    %c12 = arith.constant 12 : index
    %c0_47 = arith.constant 0 : index
    %226 = vector.load %arg17[%c12, %c0_47] : memref<16x32xf32, #tpu.memory_space<vmem>>, vector<2x32xf32>
    tpu.vector_store %arg17[%c12, %c0_47], %225 {strides = array<i32>} : memref<16x32xf32, #tpu.memory_space<vmem>>, vector<2x32xf32>,
    %227 = vector.extract_strided_slice %5 {offsets = [14, 0], sizes = [2, 96], strides = [1, 1]} : vector<16x96xf32> to vector<2x96xf32>
    %cst_48 = arith.constant dense<0.000000e+00> : vector<2x96xf32>
    %228 = tpu.matmul %225, %6, %cst_48 {dimension_numbers = #tpu.dot_dimension_numbers<[1], [0], [0], [1], [0, 0, 1, 1], [], []>} : vector<2x32xf32>, vector<32x96xf32>, vector<2x96xf32> -> vector<2x96xf32>
    %229 = vector.broadcast %7 : vector<1x96xf32> to vector<2x96xf32>
    %230 = arith.addf %228, %229 : vector<2x96xf32>
    %231 = vector.extract_strided_slice %227 {offsets = [0, 0], sizes = [2, 32], strides = [1, 1]} : vector<2x96xf32> to vector<2x32xf32>
    %232 = vector.extract_strided_slice %230 {offsets = [0, 0], sizes = [2, 32], strides = [1, 1]} : vector<2x96xf32> to vector<2x32xf32>
    %233 = arith.addf %231, %232 : vector<2x32xf32>
    %234 = arith.negf %233 : vector<2x32xf32>
    %235 = math.exp %234 : vector<2x32xf32>
    %cst_49 = arith.constant 1.000000e+00 : f32
    %236 = vector.broadcast %cst_49 : f32 to vector<2x32xf32>
    %237 = arith.addf %236, %235 : vector<2x32xf32>
    %238 = arith.divf %236, %237 : vector<2x32xf32>
    %239 = vector.extract_strided_slice %227 {offsets = [0, 32], sizes = [2, 32], strides = [1, 1]} : vector<2x96xf32> to vector<2x32xf32>
    %240 = vector.extract_strided_slice %230 {offsets = [0, 32], sizes = [2, 32], strides = [1, 1]} : vector<2x96xf32> to vector<2x32xf32>
    %241 = arith.addf %239, %240 : vector<2x32xf32>
    %242 = arith.negf %241 : vector<2x32xf32>
    %243 = math.exp %242 : vector<2x32xf32>
    %cst_50 = arith.constant 1.000000e+00 : f32
    %244 = vector.broadcast %cst_50 : f32 to vector<2x32xf32>
    %245 = arith.addf %244, %243 : vector<2x32xf32>
    %246 = arith.divf %244, %245 : vector<2x32xf32>
    %247 = vector.extract_strided_slice %227 {offsets = [0, 64], sizes = [2, 32], strides = [1, 1]} : vector<2x96xf32> to vector<2x32xf32>
    %248 = vector.extract_strided_slice %230 {offsets = [0, 64], sizes = [2, 32], strides = [1, 1]} : vector<2x96xf32> to vector<2x32xf32>
    %249 = arith.mulf %238, %248 : vector<2x32xf32>
    %250 = arith.addf %247, %249 : vector<2x32xf32>
    %251 = math.tanh %250 : vector<2x32xf32>
    %cst_51 = arith.constant 1.000000e+00 : f32
    %252 = vector.broadcast %cst_51 : f32 to vector<2x32xf32>
    %253 = arith.subf %252, %246 : vector<2x32xf32>
    %254 = arith.mulf %253, %251 : vector<2x32xf32>
    %255 = arith.mulf %246, %225 : vector<2x32xf32>
    %256 = arith.addf %254, %255 : vector<2x32xf32>
    %c14 = arith.constant 14 : index
    %c0_52 = arith.constant 0 : index
    %257 = vector.load %arg17[%c14, %c0_52] : memref<16x32xf32, #tpu.memory_space<vmem>>, vector<2x32xf32>
    tpu.vector_store %arg17[%c14, %c0_52], %256 {strides = array<i32>} : memref<16x32xf32, #tpu.memory_space<vmem>>, vector<2x32xf32>,
    %c0_53 = arith.constant 0 : index
    %c0_54 = arith.constant 0 : index
    %258 = vector.load %arg17[%c0_53, %c0_54] : memref<16x32xf32, #tpu.memory_space<vmem>>, vector<16x32xf32>
    %c0_55 = arith.constant 0 : index
    %c0_56 = arith.constant 0 : index
    %259 = vector.load %arg6[%c0_55, %c0_56] : memref<32x96xf32, #tpu.memory_space<vmem>>, vector<32x96xf32>
    %cst_57 = arith.constant dense<0.000000e+00> : vector<16x96xf32>
    %260 = tpu.matmul %258, %259, %cst_57 {dimension_numbers = #tpu.dot_dimension_numbers<[1], [0], [0], [1], [0, 0, 1, 1], [], []>} : vector<16x32xf32>, vector<32x96xf32>, vector<16x96xf32> -> vector<16x96xf32>
    %c0_58 = arith.constant 0 : index
    %c0_59 = arith.constant 0 : index
    %261 = vector.load %arg8[%c0_58, %c0_59] : memref<1x96xf32, #tpu.memory_space<vmem>>, vector<1x96xf32>
    %262 = vector.broadcast %261 : vector<1x96xf32> to vector<16x96xf32>
    %263 = arith.addf %260, %262 : vector<16x96xf32>
    %c0_60 = arith.constant 0 : index
    %c0_61 = arith.constant 0 : index
    %264 = vector.load %arg7[%c0_60, %c0_61] : memref<32x96xf32, #tpu.memory_space<vmem>>, vector<32x96xf32>
    %c0_62 = arith.constant 0 : index
    %c0_63 = arith.constant 0 : index
    %265 = vector.load %arg9[%c0_62, %c0_63] : memref<1x96xf32, #tpu.memory_space<vmem>>, vector<1x96xf32>
    %c1 = arith.constant 1 : index
    %c0_64 = arith.constant 0 : index
    %c0_65 = arith.constant 0 : index
    %266 = vector.load %arg1[%c1, %c0_64, %c0_65] : memref<2x2x32xf32, #tpu.memory_space<vmem>>, vector<1x2x32xf32>
    %267 = vector.shape_cast %266 : vector<1x2x32xf32> to vector<2x32xf32>
    %268 = vector.extract_strided_slice %263 {offsets = [0, 0], sizes = [2, 96], strides = [1, 1]} : vector<16x96xf32> to vector<2x96xf32>
    %cst_66 = arith.constant dense<0.000000e+00> : vector<2x96xf32>
    %269 = tpu.matmul %267, %264, %cst_66 {dimension_numbers = #tpu.dot_dimension_numbers<[1], [0], [0], [1], [0, 0, 1, 1], [], []>} : vector<2x32xf32>, vector<32x96xf32>, vector<2x96xf32> -> vector<2x96xf32>
    %270 = vector.broadcast %265 : vector<1x96xf32> to vector<2x96xf32>
    %271 = arith.addf %269, %270 : vector<2x96xf32>
    %272 = vector.extract_strided_slice %268 {offsets = [0, 0], sizes = [2, 32], strides = [1, 1]} : vector<2x96xf32> to vector<2x32xf32>
    %273 = vector.extract_strided_slice %271 {offsets = [0, 0], sizes = [2, 32], strides = [1, 1]} : vector<2x96xf32> to vector<2x32xf32>
    %274 = arith.addf %272, %273 : vector<2x32xf32>
    %275 = arith.negf %274 : vector<2x32xf32>
    %276 = math.exp %275 : vector<2x32xf32>
    %cst_67 = arith.constant 1.000000e+00 : f32
    %277 = vector.broadcast %cst_67 : f32 to vector<2x32xf32>
    %278 = arith.addf %277, %276 : vector<2x32xf32>
    %279 = arith.divf %277, %278 : vector<2x32xf32>
    %280 = vector.extract_strided_slice %268 {offsets = [0, 32], sizes = [2, 32], strides = [1, 1]} : vector<2x96xf32> to vector<2x32xf32>
    %281 = vector.extract_strided_slice %271 {offsets = [0, 32], sizes = [2, 32], strides = [1, 1]} : vector<2x96xf32> to vector<2x32xf32>
    %282 = arith.addf %280, %281 : vector<2x32xf32>
    %283 = arith.negf %282 : vector<2x32xf32>
    %284 = math.exp %283 : vector<2x32xf32>
    %cst_68 = arith.constant 1.000000e+00 : f32
    %285 = vector.broadcast %cst_68 : f32 to vector<2x32xf32>
    %286 = arith.addf %285, %284 : vector<2x32xf32>
    %287 = arith.divf %285, %286 : vector<2x32xf32>
    %288 = vector.extract_strided_slice %268 {offsets = [0, 64], sizes = [2, 32], strides = [1, 1]} : vector<2x96xf32> to vector<2x32xf32>
    %289 = vector.extract_strided_slice %271 {offsets = [0, 64], sizes = [2, 32], strides = [1, 1]} : vector<2x96xf32> to vector<2x32xf32>
    %290 = arith.mulf %279, %289 : vector<2x32xf32>
    %291 = arith.addf %288, %290 : vector<2x32xf32>
    %292 = math.tanh %291 : vector<2x32xf32>
    %cst_69 = arith.constant 1.000000e+00 : f32
    %293 = vector.broadcast %cst_69 : f32 to vector<2x32xf32>
    %294 = arith.subf %293, %287 : vector<2x32xf32>
    %295 = arith.mulf %294, %292 : vector<2x32xf32>
    %296 = arith.mulf %287, %267 : vector<2x32xf32>
    %297 = arith.addf %295, %296 : vector<2x32xf32>
    %298 = vector.extract_strided_slice %263 {offsets = [2, 0], sizes = [2, 96], strides = [1, 1]} : vector<16x96xf32> to vector<2x96xf32>
    %cst_70 = arith.constant dense<0.000000e+00> : vector<2x96xf32>
    %299 = tpu.matmul %297, %264, %cst_70 {dimension_numbers = #tpu.dot_dimension_numbers<[1], [0], [0], [1], [0, 0, 1, 1], [], []>} : vector<2x32xf32>, vector<32x96xf32>, vector<2x96xf32> -> vector<2x96xf32>
    %300 = vector.broadcast %265 : vector<1x96xf32> to vector<2x96xf32>
    %301 = arith.addf %299, %300 : vector<2x96xf32>
    %302 = vector.extract_strided_slice %298 {offsets = [0, 0], sizes = [2, 32], strides = [1, 1]} : vector<2x96xf32> to vector<2x32xf32>
    %303 = vector.extract_strided_slice %301 {offsets = [0, 0], sizes = [2, 32], strides = [1, 1]} : vector<2x96xf32> to vector<2x32xf32>
    %304 = arith.addf %302, %303 : vector<2x32xf32>
    %305 = arith.negf %304 : vector<2x32xf32>
    %306 = math.exp %305 : vector<2x32xf32>
    %cst_71 = arith.constant 1.000000e+00 : f32
    %307 = vector.broadcast %cst_71 : f32 to vector<2x32xf32>
    %308 = arith.addf %307, %306 : vector<2x32xf32>
    %309 = arith.divf %307, %308 : vector<2x32xf32>
    %310 = vector.extract_strided_slice %298 {offsets = [0, 32], sizes = [2, 32], strides = [1, 1]} : vector<2x96xf32> to vector<2x32xf32>
    %311 = vector.extract_strided_slice %301 {offsets = [0, 32], sizes = [2, 32], strides = [1, 1]} : vector<2x96xf32> to vector<2x32xf32>
    %312 = arith.addf %310, %311 : vector<2x32xf32>
    %313 = arith.negf %312 : vector<2x32xf32>
    %314 = math.exp %313 : vector<2x32xf32>
    %cst_72 = arith.constant 1.000000e+00 : f32
    %315 = vector.broadcast %cst_72 : f32 to vector<2x32xf32>
    %316 = arith.addf %315, %314 : vector<2x32xf32>
    %317 = arith.divf %315, %316 : vector<2x32xf32>
    %318 = vector.extract_strided_slice %298 {offsets = [0, 64], sizes = [2, 32], strides = [1, 1]} : vector<2x96xf32> to vector<2x32xf32>
    %319 = vector.extract_strided_slice %301 {offsets = [0, 64], sizes = [2, 32], strides = [1, 1]} : vector<2x96xf32> to vector<2x32xf32>
    %320 = arith.mulf %309, %319 : vector<2x32xf32>
    %321 = arith.addf %318, %320 : vector<2x32xf32>
    %322 = math.tanh %321 : vector<2x32xf32>
    %cst_73 = arith.constant 1.000000e+00 : f32
    %323 = vector.broadcast %cst_73 : f32 to vector<2x32xf32>
    %324 = arith.subf %323, %317 : vector<2x32xf32>
    %325 = arith.mulf %324, %322 : vector<2x32xf32>
    %326 = arith.mulf %317, %297 : vector<2x32xf32>
    %327 = arith.addf %325, %326 : vector<2x32xf32>
    %328 = vector.extract_strided_slice %263 {offsets = [4, 0], sizes = [2, 96], strides = [1, 1]} : vector<16x96xf32> to vector<2x96xf32>
    %cst_74 = arith.constant dense<0.000000e+00> : vector<2x96xf32>
    %329 = tpu.matmul %327, %264, %cst_74 {dimension_numbers = #tpu.dot_dimension_numbers<[1], [0], [0], [1], [0, 0, 1, 1], [], []>} : vector<2x32xf32>, vector<32x96xf32>, vector<2x96xf32> -> vector<2x96xf32>
    %330 = vector.broadcast %265 : vector<1x96xf32> to vector<2x96xf32>
    %331 = arith.addf %329, %330 : vector<2x96xf32>
    %332 = vector.extract_strided_slice %328 {offsets = [0, 0], sizes = [2, 32], strides = [1, 1]} : vector<2x96xf32> to vector<2x32xf32>
    %333 = vector.extract_strided_slice %331 {offsets = [0, 0], sizes = [2, 32], strides = [1, 1]} : vector<2x96xf32> to vector<2x32xf32>
    %334 = arith.addf %332, %333 : vector<2x32xf32>
    %335 = arith.negf %334 : vector<2x32xf32>
    %336 = math.exp %335 : vector<2x32xf32>
    %cst_75 = arith.constant 1.000000e+00 : f32
    %337 = vector.broadcast %cst_75 : f32 to vector<2x32xf32>
    %338 = arith.addf %337, %336 : vector<2x32xf32>
    %339 = arith.divf %337, %338 : vector<2x32xf32>
    %340 = vector.extract_strided_slice %328 {offsets = [0, 32], sizes = [2, 32], strides = [1, 1]} : vector<2x96xf32> to vector<2x32xf32>
    %341 = vector.extract_strided_slice %331 {offsets = [0, 32], sizes = [2, 32], strides = [1, 1]} : vector<2x96xf32> to vector<2x32xf32>
    %342 = arith.addf %340, %341 : vector<2x32xf32>
    %343 = arith.negf %342 : vector<2x32xf32>
    %344 = math.exp %343 : vector<2x32xf32>
    %cst_76 = arith.constant 1.000000e+00 : f32
    %345 = vector.broadcast %cst_76 : f32 to vector<2x32xf32>
    %346 = arith.addf %345, %344 : vector<2x32xf32>
    %347 = arith.divf %345, %346 : vector<2x32xf32>
    %348 = vector.extract_strided_slice %328 {offsets = [0, 64], sizes = [2, 32], strides = [1, 1]} : vector<2x96xf32> to vector<2x32xf32>
    %349 = vector.extract_strided_slice %331 {offsets = [0, 64], sizes = [2, 32], strides = [1, 1]} : vector<2x96xf32> to vector<2x32xf32>
    %350 = arith.mulf %339, %349 : vector<2x32xf32>
    %351 = arith.addf %348, %350 : vector<2x32xf32>
    %352 = math.tanh %351 : vector<2x32xf32>
    %cst_77 = arith.constant 1.000000e+00 : f32
    %353 = vector.broadcast %cst_77 : f32 to vector<2x32xf32>
    %354 = arith.subf %353, %347 : vector<2x32xf32>
    %355 = arith.mulf %354, %352 : vector<2x32xf32>
    %356 = arith.mulf %347, %327 : vector<2x32xf32>
    %357 = arith.addf %355, %356 : vector<2x32xf32>
    %358 = vector.extract_strided_slice %263 {offsets = [6, 0], sizes = [2, 96], strides = [1, 1]} : vector<16x96xf32> to vector<2x96xf32>
    %cst_78 = arith.constant dense<0.000000e+00> : vector<2x96xf32>
    %359 = tpu.matmul %357, %264, %cst_78 {dimension_numbers = #tpu.dot_dimension_numbers<[1], [0], [0], [1], [0, 0, 1, 1], [], []>} : vector<2x32xf32>, vector<32x96xf32>, vector<2x96xf32> -> vector<2x96xf32>
    %360 = vector.broadcast %265 : vector<1x96xf32> to vector<2x96xf32>
    %361 = arith.addf %359, %360 : vector<2x96xf32>
    %362 = vector.extract_strided_slice %358 {offsets = [0, 0], sizes = [2, 32], strides = [1, 1]} : vector<2x96xf32> to vector<2x32xf32>
    %363 = vector.extract_strided_slice %361 {offsets = [0, 0], sizes = [2, 32], strides = [1, 1]} : vector<2x96xf32> to vector<2x32xf32>
    %364 = arith.addf %362, %363 : vector<2x32xf32>
    %365 = arith.negf %364 : vector<2x32xf32>
    %366 = math.exp %365 : vector<2x32xf32>
    %cst_79 = arith.constant 1.000000e+00 : f32
    %367 = vector.broadcast %cst_79 : f32 to vector<2x32xf32>
    %368 = arith.addf %367, %366 : vector<2x32xf32>
    %369 = arith.divf %367, %368 : vector<2x32xf32>
    %370 = vector.extract_strided_slice %358 {offsets = [0, 32], sizes = [2, 32], strides = [1, 1]} : vector<2x96xf32> to vector<2x32xf32>
    %371 = vector.extract_strided_slice %361 {offsets = [0, 32], sizes = [2, 32], strides = [1, 1]} : vector<2x96xf32> to vector<2x32xf32>
    %372 = arith.addf %370, %371 : vector<2x32xf32>
    %373 = arith.negf %372 : vector<2x32xf32>
    %374 = math.exp %373 : vector<2x32xf32>
    %cst_80 = arith.constant 1.000000e+00 : f32
    %375 = vector.broadcast %cst_80 : f32 to vector<2x32xf32>
    %376 = arith.addf %375, %374 : vector<2x32xf32>
    %377 = arith.divf %375, %376 : vector<2x32xf32>
    %378 = vector.extract_strided_slice %358 {offsets = [0, 64], sizes = [2, 32], strides = [1, 1]} : vector<2x96xf32> to vector<2x32xf32>
    %379 = vector.extract_strided_slice %361 {offsets = [0, 64], sizes = [2, 32], strides = [1, 1]} : vector<2x96xf32> to vector<2x32xf32>
    %380 = arith.mulf %369, %379 : vector<2x32xf32>
    %381 = arith.addf %378, %380 : vector<2x32xf32>
    %382 = math.tanh %381 : vector<2x32xf32>
    %cst_81 = arith.constant 1.000000e+00 : f32
    %383 = vector.broadcast %cst_81 : f32 to vector<2x32xf32>
    %384 = arith.subf %383, %377 : vector<2x32xf32>
    %385 = arith.mulf %384, %382 : vector<2x32xf32>
    %386 = arith.mulf %377, %357 : vector<2x32xf32>
    %387 = arith.addf %385, %386 : vector<2x32xf32>
    %388 = vector.extract_strided_slice %263 {offsets = [8, 0], sizes = [2, 96], strides = [1, 1]} : vector<16x96xf32> to vector<2x96xf32>
    %cst_82 = arith.constant dense<0.000000e+00> : vector<2x96xf32>
    %389 = tpu.matmul %387, %264, %cst_82 {dimension_numbers = #tpu.dot_dimension_numbers<[1], [0], [0], [1], [0, 0, 1, 1], [], []>} : vector<2x32xf32>, vector<32x96xf32>, vector<2x96xf32> -> vector<2x96xf32>
    %390 = vector.broadcast %265 : vector<1x96xf32> to vector<2x96xf32>
    %391 = arith.addf %389, %390 : vector<2x96xf32>
    %392 = vector.extract_strided_slice %388 {offsets = [0, 0], sizes = [2, 32], strides = [1, 1]} : vector<2x96xf32> to vector<2x32xf32>
    %393 = vector.extract_strided_slice %391 {offsets = [0, 0], sizes = [2, 32], strides = [1, 1]} : vector<2x96xf32> to vector<2x32xf32>
    %394 = arith.addf %392, %393 : vector<2x32xf32>
    %395 = arith.negf %394 : vector<2x32xf32>
    %396 = math.exp %395 : vector<2x32xf32>
    %cst_83 = arith.constant 1.000000e+00 : f32
    %397 = vector.broadcast %cst_83 : f32 to vector<2x32xf32>
    %398 = arith.addf %397, %396 : vector<2x32xf32>
    %399 = arith.divf %397, %398 : vector<2x32xf32>
    %400 = vector.extract_strided_slice %388 {offsets = [0, 32], sizes = [2, 32], strides = [1, 1]} : vector<2x96xf32> to vector<2x32xf32>
    %401 = vector.extract_strided_slice %391 {offsets = [0, 32], sizes = [2, 32], strides = [1, 1]} : vector<2x96xf32> to vector<2x32xf32>
    %402 = arith.addf %400, %401 : vector<2x32xf32>
    %403 = arith.negf %402 : vector<2x32xf32>
    %404 = math.exp %403 : vector<2x32xf32>
    %cst_84 = arith.constant 1.000000e+00 : f32
    %405 = vector.broadcast %cst_84 : f32 to vector<2x32xf32>
    %406 = arith.addf %405, %404 : vector<2x32xf32>
    %407 = arith.divf %405, %406 : vector<2x32xf32>
    %408 = vector.extract_strided_slice %388 {offsets = [0, 64], sizes = [2, 32], strides = [1, 1]} : vector<2x96xf32> to vector<2x32xf32>
    %409 = vector.extract_strided_slice %391 {offsets = [0, 64], sizes = [2, 32], strides = [1, 1]} : vector<2x96xf32> to vector<2x32xf32>
    %410 = arith.mulf %399, %409 : vector<2x32xf32>
    %411 = arith.addf %408, %410 : vector<2x32xf32>
    %412 = math.tanh %411 : vector<2x32xf32>
    %cst_85 = arith.constant 1.000000e+00 : f32
    %413 = vector.broadcast %cst_85 : f32 to vector<2x32xf32>
    %414 = arith.subf %413, %407 : vector<2x32xf32>
    %415 = arith.mulf %414, %412 : vector<2x32xf32>
    %416 = arith.mulf %407, %387 : vector<2x32xf32>
    %417 = arith.addf %415, %416 : vector<2x32xf32>
    %418 = vector.extract_strided_slice %263 {offsets = [10, 0], sizes = [2, 96], strides = [1, 1]} : vector<16x96xf32> to vector<2x96xf32>
    %cst_86 = arith.constant dense<0.000000e+00> : vector<2x96xf32>
    %419 = tpu.matmul %417, %264, %cst_86 {dimension_numbers = #tpu.dot_dimension_numbers<[1], [0], [0], [1], [0, 0, 1, 1], [], []>} : vector<2x32xf32>, vector<32x96xf32>, vector<2x96xf32> -> vector<2x96xf32>
    %420 = vector.broadcast %265 : vector<1x96xf32> to vector<2x96xf32>
    %421 = arith.addf %419, %420 : vector<2x96xf32>
    %422 = vector.extract_strided_slice %418 {offsets = [0, 0], sizes = [2, 32], strides = [1, 1]} : vector<2x96xf32> to vector<2x32xf32>
    %423 = vector.extract_strided_slice %421 {offsets = [0, 0], sizes = [2, 32], strides = [1, 1]} : vector<2x96xf32> to vector<2x32xf32>
    %424 = arith.addf %422, %423 : vector<2x32xf32>
    %425 = arith.negf %424 : vector<2x32xf32>
    %426 = math.exp %425 : vector<2x32xf32>
    %cst_87 = arith.constant 1.000000e+00 : f32
    %427 = vector.broadcast %cst_87 : f32 to vector<2x32xf32>
    %428 = arith.addf %427, %426 : vector<2x32xf32>
    %429 = arith.divf %427, %428 : vector<2x32xf32>
    %430 = vector.extract_strided_slice %418 {offsets = [0, 32], sizes = [2, 32], strides = [1, 1]} : vector<2x96xf32> to vector<2x32xf32>
    %431 = vector.extract_strided_slice %421 {offsets = [0, 32], sizes = [2, 32], strides = [1, 1]} : vector<2x96xf32> to vector<2x32xf32>
    %432 = arith.addf %430, %431 : vector<2x32xf32>
    %433 = arith.negf %432 : vector<2x32xf32>
    %434 = math.exp %433 : vector<2x32xf32>
    %cst_88 = arith.constant 1.000000e+00 : f32
    %435 = vector.broadcast %cst_88 : f32 to vector<2x32xf32>
    %436 = arith.addf %435, %434 : vector<2x32xf32>
    %437 = arith.divf %435, %436 : vector<2x32xf32>
    %438 = vector.extract_strided_slice %418 {offsets = [0, 64], sizes = [2, 32], strides = [1, 1]} : vector<2x96xf32> to vector<2x32xf32>
    %439 = vector.extract_strided_slice %421 {offsets = [0, 64], sizes = [2, 32], strides = [1, 1]} : vector<2x96xf32> to vector<2x32xf32>
    %440 = arith.mulf %429, %439 : vector<2x32xf32>
    %441 = arith.addf %438, %440 : vector<2x32xf32>
    %442 = math.tanh %441 : vector<2x32xf32>
    %cst_89 = arith.constant 1.000000e+00 : f32
    %443 = vector.broadcast %cst_89 : f32 to vector<2x32xf32>
    %444 = arith.subf %443, %437 : vector<2x32xf32>
    %445 = arith.mulf %444, %442 : vector<2x32xf32>
    %446 = arith.mulf %437, %417 : vector<2x32xf32>
    %447 = arith.addf %445, %446 : vector<2x32xf32>
    %448 = vector.extract_strided_slice %263 {offsets = [12, 0], sizes = [2, 96], strides = [1, 1]} : vector<16x96xf32> to vector<2x96xf32>
    %cst_90 = arith.constant dense<0.000000e+00> : vector<2x96xf32>
    %449 = tpu.matmul %447, %264, %cst_90 {dimension_numbers = #tpu.dot_dimension_numbers<[1], [0], [0], [1], [0, 0, 1, 1], [], []>} : vector<2x32xf32>, vector<32x96xf32>, vector<2x96xf32> -> vector<2x96xf32>
    %450 = vector.broadcast %265 : vector<1x96xf32> to vector<2x96xf32>
    %451 = arith.addf %449, %450 : vector<2x96xf32>
    %452 = vector.extract_strided_slice %448 {offsets = [0, 0], sizes = [2, 32], strides = [1, 1]} : vector<2x96xf32> to vector<2x32xf32>
    %453 = vector.extract_strided_slice %451 {offsets = [0, 0], sizes = [2, 32], strides = [1, 1]} : vector<2x96xf32> to vector<2x32xf32>
    %454 = arith.addf %452, %453 : vector<2x32xf32>
    %455 = arith.negf %454 : vector<2x32xf32>
    %456 = math.exp %455 : vector<2x32xf32>
    %cst_91 = arith.constant 1.000000e+00 : f32
    %457 = vector.broadcast %cst_91 : f32 to vector<2x32xf32>
    %458 = arith.addf %457, %456 : vector<2x32xf32>
    %459 = arith.divf %457, %458 : vector<2x32xf32>
    %460 = vector.extract_strided_slice %448 {offsets = [0, 32], sizes = [2, 32], strides = [1, 1]} : vector<2x96xf32> to vector<2x32xf32>
    %461 = vector.extract_strided_slice %451 {offsets = [0, 32], sizes = [2, 32], strides = [1, 1]} : vector<2x96xf32> to vector<2x32xf32>
    %462 = arith.addf %460, %461 : vector<2x32xf32>
    %463 = arith.negf %462 : vector<2x32xf32>
    %464 = math.exp %463 : vector<2x32xf32>
    %cst_92 = arith.constant 1.000000e+00 : f32
    %465 = vector.broadcast %cst_92 : f32 to vector<2x32xf32>
    %466 = arith.addf %465, %464 : vector<2x32xf32>
    %467 = arith.divf %465, %466 : vector<2x32xf32>
    %468 = vector.extract_strided_slice %448 {offsets = [0, 64], sizes = [2, 32], strides = [1, 1]} : vector<2x96xf32> to vector<2x32xf32>
    %469 = vector.extract_strided_slice %451 {offsets = [0, 64], sizes = [2, 32], strides = [1, 1]} : vector<2x96xf32> to vector<2x32xf32>
    %470 = arith.mulf %459, %469 : vector<2x32xf32>
    %471 = arith.addf %468, %470 : vector<2x32xf32>
    %472 = math.tanh %471 : vector<2x32xf32>
    %cst_93 = arith.constant 1.000000e+00 : f32
    %473 = vector.broadcast %cst_93 : f32 to vector<2x32xf32>
    %474 = arith.subf %473, %467 : vector<2x32xf32>
    %475 = arith.mulf %474, %472 : vector<2x32xf32>
    %476 = arith.mulf %467, %447 : vector<2x32xf32>
    %477 = arith.addf %475, %476 : vector<2x32xf32>
    %478 = vector.extract_strided_slice %263 {offsets = [14, 0], sizes = [2, 96], strides = [1, 1]} : vector<16x96xf32> to vector<2x96xf32>
    %cst_94 = arith.constant dense<0.000000e+00> : vector<2x96xf32>
    %479 = tpu.matmul %477, %264, %cst_94 {dimension_numbers = #tpu.dot_dimension_numbers<[1], [0], [0], [1], [0, 0, 1, 1], [], []>} : vector<2x32xf32>, vector<32x96xf32>, vector<2x96xf32> -> vector<2x96xf32>
    %480 = vector.broadcast %265 : vector<1x96xf32> to vector<2x96xf32>
    %481 = arith.addf %479, %480 : vector<2x96xf32>
    %482 = vector.extract_strided_slice %478 {offsets = [0, 0], sizes = [2, 32], strides = [1, 1]} : vector<2x96xf32> to vector<2x32xf32>
    %483 = vector.extract_strided_slice %481 {offsets = [0, 0], sizes = [2, 32], strides = [1, 1]} : vector<2x96xf32> to vector<2x32xf32>
    %484 = arith.addf %482, %483 : vector<2x32xf32>
    %485 = arith.negf %484 : vector<2x32xf32>
    %486 = math.exp %485 : vector<2x32xf32>
    %cst_95 = arith.constant 1.000000e+00 : f32
    %487 = vector.broadcast %cst_95 : f32 to vector<2x32xf32>
    %488 = arith.addf %487, %486 : vector<2x32xf32>
    %489 = arith.divf %487, %488 : vector<2x32xf32>
    %490 = vector.extract_strided_slice %478 {offsets = [0, 32], sizes = [2, 32], strides = [1, 1]} : vector<2x96xf32> to vector<2x32xf32>
    %491 = vector.extract_strided_slice %481 {offsets = [0, 32], sizes = [2, 32], strides = [1, 1]} : vector<2x96xf32> to vector<2x32xf32>
    %492 = arith.addf %490, %491 : vector<2x32xf32>
    %493 = arith.negf %492 : vector<2x32xf32>
    %494 = math.exp %493 : vector<2x32xf32>
    %cst_96 = arith.constant 1.000000e+00 : f32
    %495 = vector.broadcast %cst_96 : f32 to vector<2x32xf32>
    %496 = arith.addf %495, %494 : vector<2x32xf32>
    %497 = arith.divf %495, %496 : vector<2x32xf32>
    %498 = vector.extract_strided_slice %478 {offsets = [0, 64], sizes = [2, 32], strides = [1, 1]} : vector<2x96xf32> to vector<2x32xf32>
    %499 = vector.extract_strided_slice %481 {offsets = [0, 64], sizes = [2, 32], strides = [1, 1]} : vector<2x96xf32> to vector<2x32xf32>
    %500 = arith.mulf %489, %499 : vector<2x32xf32>
    %501 = arith.addf %498, %500 : vector<2x32xf32>
    %502 = math.tanh %501 : vector<2x32xf32>
    %cst_97 = arith.constant 1.000000e+00 : f32
    %503 = vector.broadcast %cst_97 : f32 to vector<2x32xf32>
    %504 = arith.subf %503, %497 : vector<2x32xf32>
    %505 = arith.mulf %504, %502 : vector<2x32xf32>
    %506 = arith.mulf %497, %477 : vector<2x32xf32>
    %507 = arith.addf %505, %506 : vector<2x32xf32>
    %c0_98 = arith.constant 0 : index
    %c0_99 = arith.constant 0 : index
    %508 = vector.load %arg11[%c0_98, %c0_99] : memref<1x32xf32, #tpu.memory_space<vmem>>, vector<1x32xf32>
    %c0_100 = arith.constant 0 : index
    %c0_101 = arith.constant 0 : index
    %c0_102 = arith.constant 0 : index
    %509 = vector.load %arg10[%c0_100, %c0_101, %c0_102] : memref<2x32x32xf32, #tpu.memory_space<vmem>>, vector<1x32x32xf32>
    %510 = vector.shape_cast %509 : vector<1x32x32xf32> to vector<32x32xf32>
    %cst_103 = arith.constant dense<0.000000e+00> : vector<2x32xf32>
    %511 = tpu.matmul %256, %510, %cst_103 {dimension_numbers = #tpu.dot_dimension_numbers<[1], [0], [0], [1], [0, 0, 1, 1], [], []>} : vector<2x32xf32>, vector<32x32xf32>, vector<2x32xf32> -> vector<2x32xf32>
    %512 = vector.broadcast %508 : vector<1x32xf32> to vector<2x32xf32>
    %513 = arith.addf %512, %511 : vector<2x32xf32>
    %c1_104 = arith.constant 1 : index
    %c0_105 = arith.constant 0 : index
    %c0_106 = arith.constant 0 : index
    %514 = vector.load %arg10[%c1_104, %c0_105, %c0_106] : memref<2x32x32xf32, #tpu.memory_space<vmem>>, vector<1x32x32xf32>
    %515 = vector.shape_cast %514 : vector<1x32x32xf32> to vector<32x32xf32>
    %cst_107 = arith.constant dense<0.000000e+00> : vector<2x32xf32>
    %516 = tpu.matmul %507, %515, %cst_107 {dimension_numbers = #tpu.dot_dimension_numbers<[1], [0], [0], [1], [0, 0, 1, 1], [], []>} : vector<2x32xf32>, vector<32x32xf32>, vector<2x32xf32> -> vector<2x32xf32>
    %517 = arith.addf %513, %516 : vector<2x32xf32>
    %c0_108 = arith.constant 0 : index
    %c0_109 = arith.constant 0 : index
    %518 = vector.load %arg12[%c0_108, %c0_109] : memref<32x96xf32, #tpu.memory_space<vmem>>, vector<32x96xf32>
    %cst_110 = arith.constant dense<0.000000e+00> : vector<2x96xf32>
    %519 = tpu.matmul %517, %518, %cst_110 {dimension_numbers = #tpu.dot_dimension_numbers<[1], [0], [0], [1], [0, 0, 1, 1], [], []>} : vector<2x32xf32>, vector<32x96xf32>, vector<2x96xf32> -> vector<2x96xf32>
    %c0_111 = arith.constant 0 : index
    %c0_112 = arith.constant 0 : index
    %520 = vector.load %arg13[%c0_111, %c0_112] : memref<1x96xf32, #tpu.memory_space<vmem>>, vector<1x96xf32>
    %521 = vector.broadcast %520 : vector<1x96xf32> to vector<2x96xf32>
    %522 = arith.addf %519, %521 : vector<2x96xf32>
    %523 = vector.extract_strided_slice %522 {offsets = [0, 0], sizes = [2, 32], strides = [1, 1]} : vector<2x96xf32> to vector<2x32xf32>
    %524 = vector.extract_strided_slice %522 {offsets = [0, 32], sizes = [2, 32], strides = [1, 1]} : vector<2x96xf32> to vector<2x32xf32>
    %525 = vector.extract_strided_slice %522 {offsets = [0, 64], sizes = [2, 32], strides = [1, 1]} : vector<2x96xf32> to vector<2x32xf32>
    %526 = tpu.transpose %524, [1, 0] : vector<2x32xf32> -> vector<32x2xf32>
    %cst_113 = arith.constant dense<0.000000e+00> : vector<32x32xf32>
    %527 = tpu.matmul %526, %523, %cst_113 {dimension_numbers = #tpu.dot_dimension_numbers<[1], [0], [0], [1], [0, 0, 1, 1], [], []>} : vector<32x2xf32>, vector<2x32xf32>, vector<32x32xf32> -> vector<32x32xf32>
    %cst_114 = arith.constant 0.176776692 : f32
    %528 = vector.broadcast %cst_114 : f32 to vector<32x32xf32>
    %529 = arith.mulf %527, %528 : vector<32x32xf32>
    %cst_115 = arith.constant dense<0xFF800000> : vector<32xf32>
    %530 = vector.multi_reduction <maximumf>, %529, %cst_115 [1] : vector<32x32xf32> to vector<32xf32>
    %531 = vector.shape_cast %530 : vector<32xf32> to vector<32x1xf32>
    %532 = vector.broadcast %531 : vector<32x1xf32> to vector<32x32xf32>
    %533 = arith.subf %529, %532 : vector<32x32xf32>
    %534 = math.exp %533 : vector<32x32xf32>
    %cst_116 = arith.constant dense<0.000000e+00> : vector<32xf32>
    %535 = vector.multi_reduction <add>, %534, %cst_116 [1] : vector<32x32xf32> to vector<32xf32>
    %536 = vector.shape_cast %535 : vector<32xf32> to vector<32x1xf32>
    %537 = vector.broadcast %536 : vector<32x1xf32> to vector<32x32xf32>
    %538 = arith.divf %534, %537 : vector<32x32xf32>
    %cst_117 = arith.constant dense<0.000000e+00> : vector<2x32xf32>
    %539 = tpu.matmul %525, %538, %cst_117 {dimension_numbers = #tpu.dot_dimension_numbers<[1], [0], [0], [1], [0, 0, 1, 1], [], []>} : vector<2x32xf32>, vector<32x32xf32>, vector<2x32xf32> -> vector<2x32xf32>
    %c0_118 = arith.constant 0 : index
    %c0_119 = arith.constant 0 : index
    %540 = vector.load %arg14[%c0_118, %c0_119] : memref<32x32xf32, #tpu.memory_space<vmem>>, vector<32x32xf32>
    %cst_120 = arith.constant dense<0.000000e+00> : vector<2x32xf32>
    %541 = tpu.matmul %539, %540, %cst_120 {dimension_numbers = #tpu.dot_dimension_numbers<[1], [0], [0], [1], [0, 0, 1, 1], [], []>} : vector<2x32xf32>, vector<32x32xf32>, vector<2x32xf32> -> vector<2x32xf32>
    %c0_121 = arith.constant 0 : index
    %c0_122 = arith.constant 0 : index
    %542 = vector.load %arg15[%c0_121, %c0_122] : memref<1x32xf32, #tpu.memory_space<vmem>>, vector<1x32xf32>
    %543 = vector.broadcast %542 : vector<1x32xf32> to vector<2x32xf32>
    %544 = arith.addf %541, %543 : vector<2x32xf32>
    %c0_123 = arith.constant 0 : index
    %c0_124 = arith.constant 0 : index
    %545 = vector.load %arg16[%c0_123, %c0_124] : memref<2x32xf32, #tpu.memory_space<vmem>>, vector<2x32xf32>
    tpu.vector_store %arg16[%c0_123, %c0_124], %544 {strides = array<i32>} : memref<2x32xf32, #tpu.memory_space<vmem>>, vector<2x32xf32>,
    return
  }
}

</mosaic_0001>

<llo_original>
// kernel: energy_encoder_net_forward.1
$region0: #{energy_encoder_net_forward.1}
  #allocation0 [shape = 'u32[]', space=smem, size = 0x4, offset = 0x4, fixed_abs, tag = 'smem constant byte address 0x4 - core index']
  #allocation1 [shape = 'u32[72,128]{1,0:T(1,128)}', space=vmem, size = 0x9000, scoped, tag = 'internal scratch']
  #allocation2 [shape = 'f32[16,32]{1,0:T(8,128)}', space=vmem, size = 0x2000, scoped, tag = 'scratch operand']
  %s0 = inlined_call_operand.vmem [shape: f32[16,4], index: 0, kind: input, shape index: {}]
  %s1 = inlined_call_operand.hbm [shape: f32[2,2,32], index: 1, kind: input, shape index: {}]
  %s2 = inlined_call_operand.hbm [shape: f32[4,96], index: 2, kind: input, shape index: {}]
  %s3 = inlined_call_operand.vmem [shape: f32[32,96], index: 3, kind: input, shape index: {}]
  %s4 = inlined_call_operand.hbm [shape: f32[1,96], index: 4, kind: input, shape index: {}]
  %s5 = inlined_call_operand.hbm [shape: f32[1,96], index: 5, kind: input, shape index: {}]
  %s6 = inlined_call_operand.hbm [shape: f32[32,96], index: 6, kind: input, shape index: {}]
  %s7 = inlined_call_operand.hbm [shape: f32[32,96], index: 7, kind: input, shape index: {}]
  %s8 = inlined_call_operand.vmem [shape: f32[1,96], index: 8, kind: input, shape index: {}]
  %s9 = inlined_call_operand.vmem [shape: f32[1,96], index: 9, kind: input, shape index: {}]
  %s10 = inlined_call_operand.hbm [shape: f32[2,32,32], index: 10, kind: input, shape index: {}]
  %s11 = inlined_call_operand.hbm [shape: f32[1,32], index: 11, kind: input, shape index: {}]
  %s12 = inlined_call_operand.hbm [shape: f32[32,96], index: 12, kind: input, shape index: {}]
  %s13 = inlined_call_operand.hbm [shape: f32[1,96], index: 13, kind: input, shape index: {}]
  %s14 = inlined_call_operand.hbm [shape: f32[32,32], index: 14, kind: input, shape index: {}]
  %s15 = inlined_call_operand.hbm [shape: f32[1,32], index: 15, kind: input, shape index: {}]
  %s16 = inlined_call_operand.hbm [shape: f32[2,32], index: 16, kind: output, shape index: {}]
  %s17 = sld [smem:[#allocation0]]
  $region122: #{energy_encoder_net_forward.1} parent=0
    _
  %s19 = ssub.s32 1, %s17
  %s20 = scalar_select 0, %s19, %s17
  $region1: #{energy_encoder_net_forward.1} parent=0
    #allocation3 [shape = 'u8[2048]{0}', space=vmem, size = 0x800, scoped, tag = 'input window, operand 1, single buffered']
    #allocation4 [shape = 's32[1]{0}', space=sflag, size = 0x4, scoped, tag = 'scoped memory for energy_encoder_net_forward.1']
    #allocation5 [shape = 's32[1]{0}', space=sflag, size = 0x4, scoped, tag = 'scoped memory for energy_encoder_net_forward.1']
    #allocation6 [shape = 'u8[2048]{0}', space=vmem, size = 0x800, scoped, tag = 'input window, operand 2, single buffered']
    #allocation7 [shape = 's32[1]{0}', space=sflag, size = 0x4, scoped, tag = 'scoped memory for energy_encoder_net_forward.1']
    #allocation8 [shape = 'u8[512]{0}', space=vmem, size = 0x400, scoped, tag = 'input window, operand 4, single buffered']
    #allocation9 [shape = 'u8[512]{0}', space=vmem, size = 0x400, scoped, tag = 'input window, operand 5, single buffered']
    #allocation10 [shape = 's32[1]{0}', space=sflag, size = 0x4, scoped, tag = 'scoped memory for energy_encoder_net_forward.1']
    #allocation11 [shape = 'u8[16384]{0}', space=vmem, size = 0x4000, scoped, tag = 'input window, operand 6, single buffered']
    #allocation12 [shape = 'u8[16384]{0}', space=vmem, size = 0x4000, scoped, tag = 'input window, operand 7, single buffered']
    #allocation13 [shape = 's32[1]{0}', space=sflag, size = 0x4, scoped, tag = 'scoped memory for energy_encoder_net_forward.1']
    #allocation14 [shape = 'u8[32768]{0}', space=vmem, size = 0x8000, scoped, tag = 'input window, operand 10, single buffered']
    #allocation15 [shape = 'u8[512]{0}', space=vmem, size = 0x400, scoped, tag = 'input window, operand 11, single buffered']
    #allocation16 [shape = 's32[1]{0}', space=sflag, size = 0x4, scoped, tag = 'scoped memory for energy_encoder_net_forward.1']
    #allocation17 [shape = 'u8[16384]{0}', space=vmem, size = 0x4000, scoped, tag = 'input window, operand 12, single buffered']
    #allocation18 [shape = 'u8[512]{0}', space=vmem, size = 0x400, scoped, tag = 'input window, operand 13, single buffered']
    #allocation19 [shape = 's32[1]{0}', space=sflag, size = 0x4, scoped, tag = 'scoped memory for energy_encoder_net_forward.1']
    #allocation20 [shape = 'u8[16384]{0}', space=vmem, size = 0x4000, scoped, tag = 'input window, operand 14, single buffered']
    #allocation21 [shape = 'u8[512]{0}', space=vmem, size = 0x400, scoped, tag = 'input window, operand 15, single buffered']
    #allocation22 [shape = 's32[1]{0}', space=sflag, size = 0x4, scoped, tag = 'scoped memory for energy_encoder_net_forward.1']
    #allocation23 [shape = 'u8[1024]{0}', space=vmem, size = 0x400, scoped, tag = 'output window, operand 0, single buffered']
    %21 = vsyncpa [#allocation4], 0
    %22 = vsyncpa [#allocation7], 0
    %23 = vsyncpa [#allocation10], 0
    %24 = vsyncpa [#allocation13], 0
    %25 = vsyncpa [#allocation16], 0
    %26 = vsyncpa [#allocation19], 0
    %27 = vsyncpa [#allocation22], 0
    %28 = vsyncpa [#allocation5], 0
    // Predicated region
    $region2: #{energy_encoder_net_forward.1} parent=1 // pred_check
      _
    $region3: #{energy_encoder_net_forward.1} parent=1 // pred_check_branch
      %30 = sbr.rel (0) target = $region5
    $region4: #{energy_encoder_net_forward.1} parent=1 // pred_region
      _
    $region5: #{energy_encoder_net_forward.1} parent=1 // pred_fallthru
      _
    // Predicated region
    $region6: #{energy_encoder_net_forward.1} parent=1 // pred_check
      _
    $region7: #{energy_encoder_net_forward.1} parent=1 // pred_check_branch
      %32 = sbr.rel (0) target = $region9
    $region8: #{energy_encoder_net_forward.1} parent=1 // pred_region
      %34 = vsyncadd [#allocation4], 0
      %s35 = sshll.u32 %s1, 4
      %s36 = int_to_ptr.hbm [resolvable:$true] %s35
      %s37 = sshll.u32 [#allocation3], 4
      %s38 = int_to_ptr.vmem [resolvable:$true] %s37
      %43 = dma.hbm_to_vmem [thread:$0]  %s36, 64, %s38, [#allocation4], 32, 32, 2
    $region9: #{energy_encoder_net_forward.1} parent=1 // pred_fallthru
      _
    // Predicated region
    $region10: #{energy_encoder_net_forward.1} parent=1 // pred_check
      _
    $region11: #{energy_encoder_net_forward.1} parent=1 // pred_check_branch
      %45 = sbr.rel (0) target = $region13
    $region12: #{energy_encoder_net_forward.1} parent=1 // pred_region
      %47 = vsyncadd [#allocation7], 0
      %s49 = sshll.u32 %s2, 4
      %s50 = int_to_ptr.hbm [resolvable:$true] %s49
      %s51 = sshll.u32 [#allocation6], 4
      %s52 = int_to_ptr.vmem [resolvable:$true] %s51
      %54 = dma.hbm_to_vmem [thread:$0]  %s50, 64, %s52, [#allocation7]
    $region13: #{energy_encoder_net_forward.1} parent=1 // pred_fallthru
      _
    // Predicated region
    $region14: #{energy_encoder_net_forward.1} parent=1 // pred_check
      _
    $region15: #{energy_encoder_net_forward.1} parent=1 // pred_check_branch
      %56 = sbr.rel (0) target = $region17
    $region16: #{energy_encoder_net_forward.1} parent=1 // pred_region
      _
    $region17: #{energy_encoder_net_forward.1} parent=1 // pred_fallthru
      _
    // Predicated region
    $region18: #{energy_encoder_net_forward.1} parent=1 // pred_check
      _
    $region19: #{energy_encoder_net_forward.1} parent=1 // pred_check_branch
      %58 = sbr.rel (0) target = $region21
    $region20: #{energy_encoder_net_forward.1} parent=1 // pred_region
      %60 = vsyncadd [#allocation7], 0
      %s62 = sshll.u32 %s4, 4
      %s63 = int_to_ptr.hbm [resolvable:$true] %s62
      %s64 = sshll.u32 [#allocation8], 4
      %s65 = int_to_ptr.vmem [resolvable:$true] %s64
      %67 = dma.hbm_to_vmem [thread:$0]  %s63, 16, %s65, [#allocation7]
    $region21: #{energy_encoder_net_forward.1} parent=1 // pred_fallthru
      _
    // Predicated region
    $region22: #{energy_encoder_net_forward.1} parent=1 // pred_check
      _
    $region23: #{energy_encoder_net_forward.1} parent=1 // pred_check_branch
      %69 = sbr.rel (0) target = $region25
    $region24: #{energy_encoder_net_forward.1} parent=1 // pred_region
      %71 = vsyncadd [#allocation10], 0
      %s73 = sshll.u32 %s5, 4
      %s74 = int_to_ptr.hbm [resolvable:$true] %s73
      %s75 = sshll.u32 [#allocation9], 4
      %s76 = int_to_ptr.vmem [resolvable:$true] %s75
      %78 = dma.hbm_to_vmem [thread:$0]  %s74, 16, %s76, [#allocation10]
    $region25: #{energy_encoder_net_forward.1} parent=1 // pred_fallthru
      _
    // Predicated region
    $region26: #{energy_encoder_net_forward.1} parent=1 // pred_check
      _
    $region27: #{energy_encoder_net_forward.1} parent=1 // pred_check_branch
      %80 = sbr.rel (0) target = $region29
    $region28: #{energy_encoder_net_forward.1} parent=1 // pred_region
      %82 = vsyncadd [#allocation10], 0
      %s83 = sshll.u32 %s6, 4
      %s84 = int_to_ptr.hbm [resolvable:$true] %s83
      %s85 = sshll.u32 [#allocation11], 4
      %s86 = int_to_ptr.vmem [resolvable:$true] %s85
      %91 = dma.hbm_to_vmem [thread:$0]  %s84, 512, %s86, [#allocation10], 128, 128, 8
    $region29: #{energy_encoder_net_forward.1} parent=1 // pred_fallthru
      _
    // Predicated region
    $region30: #{energy_encoder_net_forward.1} parent=1 // pred_check
      _
    $region31: #{energy_encoder_net_forward.1} parent=1 // pred_check_branch
      %93 = sbr.rel (0) target = $region33
    $region32: #{energy_encoder_net_forward.1} parent=1 // pred_region
      %95 = vsyncadd [#allocation13], 0
      %s96 = sshll.u32 %s7, 4
      %s97 = int_to_ptr.hbm [resolvable:$true] %s96
      %s98 = sshll.u32 [#allocation12], 4
      %s99 = int_to_ptr.vmem [resolvable:$true] %s98
      %104 = dma.hbm_to_vmem [thread:$0]  %s97, 512, %s99, [#allocation13], 128, 128, 8
    $region33: #{energy_encoder_net_forward.1} parent=1 // pred_fallthru
      _
    // Predicated region
    $region34: #{energy_encoder_net_forward.1} parent=1 // pred_check
      _
    $region35: #{energy_encoder_net_forward.1} parent=1 // pred_check_branch
      %106 = sbr.rel (0) target = $region37
    $region36: #{energy_encoder_net_forward.1} parent=1 // pred_region
      _
    $region37: #{energy_encoder_net_forward.1} parent=1 // pred_fallthru
      _
    // Predicated region
    $region38: #{energy_encoder_net_forward.1} parent=1 // pred_check
      _
    $region39: #{energy_encoder_net_forward.1} parent=1 // pred_check_branch
      %108 = sbr.rel (0) target = $region41
    $region40: #{energy_encoder_net_forward.1} parent=1 // pred_region
      _
    $region41: #{energy_encoder_net_forward.1} parent=1 // pred_fallthru
      _
    // Predicated region
    $region42: #{energy_encoder_net_forward.1} parent=1 // pred_check
      _
    $region43: #{energy_encoder_net_forward.1} parent=1 // pred_check_branch
      %110 = sbr.rel (0) target = $region45
    $region44: #{energy_encoder_net_forward.1} parent=1 // pred_region
      %112 = vsyncadd [#allocation13], 0
      %s113 = sshll.u32 %s10, 4
      %s114 = int_to_ptr.hbm [resolvable:$true] %s113
      %s115 = sshll.u32 [#allocation14], 4
      %s116 = int_to_ptr.vmem [resolvable:$true] %s115
      %121 = dma.hbm_to_vmem [thread:$0]  %s114, 1024, %s116, [#allocation13], 128, 128, 8
    $region45: #{energy_encoder_net_forward.1} parent=1 // pred_fallthru
      _
    // Predicated region
    $region46: #{energy_encoder_net_forward.1} parent=1 // pred_check
      _
    $region47: #{energy_encoder_net_forward.1} parent=1 // pred_check_branch
      %123 = sbr.rel (0) target = $region49
    $region48: #{energy_encoder_net_forward.1} parent=1 // pred_region
      %125 = vsyncadd [#allocation16], 0
      %s127 = sshll.u32 %s11, 4
      %s128 = int_to_ptr.hbm [resolvable:$true] %s127
      %s129 = sshll.u32 [#allocation15], 4
      %s130 = int_to_ptr.vmem [resolvable:$true] %s129
      %132 = dma.hbm_to_vmem [thread:$0]  %s128, 16, %s130, [#allocation16]
    $region49: #{energy_encoder_net_forward.1} parent=1 // pred_fallthru
      _
    // Predicated region
    $region50: #{energy_encoder_net_forward.1} parent=1 // pred_check
      _
    $region51: #{energy_encoder_net_forward.1} parent=1 // pred_check_branch
      %134 = sbr.rel (0) target = $region53
    $region52: #{energy_encoder_net_forward.1} parent=1 // pred_region
      %136 = vsyncadd [#allocation16], 0
      %s137 = sshll.u32 %s12, 4
      %s138 = int_to_ptr.hbm [resolvable:$true] %s137
      %s139 = sshll.u32 [#allocation17], 4
      %s140 = int_to_ptr.vmem [resolvable:$true] %s139
      %145 = dma.hbm_to_vmem [thread:$0]  %s138, 512, %s140, [#allocation16], 128, 128, 8
    $region53: #{energy_encoder_net_forward.1} parent=1 // pred_fallthru
      _
    // Predicated region
    $region54: #{energy_encoder_net_forward.1} parent=1 // pred_check
      _
    $region55: #{energy_encoder_net_forward.1} parent=1 // pred_check_branch
      %147 = sbr.rel (0) target = $region57
    $region56: #{energy_encoder_net_forward.1} parent=1 // pred_region
      %149 = vsyncadd [#allocation19], 0
      %s151 = sshll.u32 %s13, 4
      %s152 = int_to_ptr.hbm [resolvable:$true] %s151
      %s153 = sshll.u32 [#allocation18], 4
      %s154 = int_to_ptr.vmem [resolvable:$true] %s153
      %156 = dma.hbm_to_vmem [thread:$0]  %s152, 16, %s154, [#allocation19]
    $region57: #{energy_encoder_net_forward.1} parent=1 // pred_fallthru
      _
    // Predicated region
    $region58: #{energy_encoder_net_forward.1} parent=1 // pred_check
      _
    $region59: #{energy_encoder_net_forward.1} parent=1 // pred_check_branch
      %158 = sbr.rel (0) target = $region61
    $region60: #{energy_encoder_net_forward.1} parent=1 // pred_region
      %160 = vsyncadd [#allocation19], 0
      %s161 = sshll.u32 %s14, 4
      %s162 = int_to_ptr.hbm [resolvable:$true] %s161
      %s163 = sshll.u32 [#allocation20], 4
      %s164 = int_to_ptr.vmem [resolvable:$true] %s163
      %169 = dma.hbm_to_vmem [thread:$0]  %s162, 512, %s164, [#allocation19], 128, 128, 8
    $region61: #{energy_encoder_net_forward.1} parent=1 // pred_fallthru
      _
    // Predicated region
    $region62: #{energy_encoder_net_forward.1} parent=1 // pred_check
      _
    $region63: #{energy_encoder_net_forward.1} parent=1 // pred_check_branch
      %171 = sbr.rel (0) target = $region65
    $region64: #{energy_encoder_net_forward.1} parent=1 // pred_region
      %173 = vsyncadd [#allocation22], 0
      %s175 = sshll.u32 %s15, 4
      %s176 = int_to_ptr.hbm [resolvable:$true] %s175
      %s177 = sshll.u32 [#allocation21], 4
      %s178 = int_to_ptr.vmem [resolvable:$true] %s177
      %180 = dma.hbm_to_vmem [thread:$0]  %s176, 16, %s178, [#allocation22]
    $region65: #{energy_encoder_net_forward.1} parent=1 // pred_fallthru
      _
    // Predicated region
    $region66: #{energy_encoder_net_forward.1} parent=1 // pred_check
      _
    $region67: #{energy_encoder_net_forward.1} parent=1 // pred_check_branch
      %182 = sbr.rel (0) target = $region69
    $region68: #{energy_encoder_net_forward.1} parent=1 // pred_region
      %184 = dma.done [#allocation4], 64
    $region69: #{energy_encoder_net_forward.1} parent=1 // pred_fallthru
      _
    // Predicated region
    $region70: #{energy_encoder_net_forward.1} parent=1 // pred_check
      _
    $region71: #{energy_encoder_net_forward.1} parent=1 // pred_check_branch
      %186 = sbr.rel (0) target = $region73
    $region72: #{energy_encoder_net_forward.1} parent=1 // pred_region
      %188 = dma.done [#allocation7], 64
    $region73: #{energy_encoder_net_forward.1} parent=1 // pred_fallthru
      _
    // Predicated region
    $region74: #{energy_encoder_net_forward.1} parent=1 // pred_check
      _
    $region75: #{energy_encoder_net_forward.1} parent=1 // pred_check_branch
      %190 = sbr.rel (0) target = $region77
    $region76: #{energy_encoder_net_forward.1} parent=1 // pred_region
      %192 = dma.done [#allocation7], 16
    $region77: #{energy_encoder_net_forward.1} parent=1 // pred_fallthru
      _
    // Predicated region
    $region78: #{energy_encoder_net_forward.1} parent=1 // pred_check
      _
    $region79: #{energy_encoder_net_forward.1} parent=1 // pred_check_branch
      %194 = sbr.rel (0) target = $region81
    $region80: #{energy_encoder_net_forward.1} parent=1 // pred_region
      %196 = dma.done [#allocation10], 16
    $region81: #{energy_encoder_net_forward.1} parent=1 // pred_fallthru
      _
    // Predicated region
    $region82: #{energy_encoder_net_forward.1} parent=1 // pred_check
      _
    $region83: #{energy_encoder_net_forward.1} parent=1 // pred_check_branch
      %198 = sbr.rel (0) target = $region85
    $region84: #{energy_encoder_net_forward.1} parent=1 // pred_region
      %200 = dma.done [#allocation10], 512
    $region85: #{energy_encoder_net_forward.1} parent=1 // pred_fallthru
      _
    // Predicated region
    $region86: #{energy_encoder_net_forward.1} parent=1 // pred_check
      _
    $region87: #{energy_encoder_net_forward.1} parent=1 // pred_check_branch
      %202 = sbr.rel (0) target = $region89
    $region88: #{energy_encoder_net_forward.1} parent=1 // pred_region
      %204 = dma.done [#allocation13], 512
    $region89: #{energy_encoder_net_forward.1} parent=1 // pred_fallthru
      _
    // Predicated region
    $region90: #{energy_encoder_net_forward.1} parent=1 // pred_check
      _
    $region91: #{energy_encoder_net_forward.1} parent=1 // pred_check_branch
      %206 = sbr.rel (0) target = $region93
    $region92: #{energy_encoder_net_forward.1} parent=1 // pred_region
      %208 = dma.done [#allocation13], 1024
    $region93: #{energy_encoder_net_forward.1} parent=1 // pred_fallthru
      _
    // Predicated region
    $region94: #{energy_encoder_net_forward.1} parent=1 // pred_check
      _
    $region95: #{energy_encoder_net_forward.1} parent=1 // pred_check_branch
      %210 = sbr.rel (0) target = $region97
    $region96: #{energy_encoder_net_forward.1} parent=1 // pred_region
      %212 = dma.done [#allocation16], 16
    $region97: #{energy_encoder_net_forward.1} parent=1 // pred_fallthru
      _
    // Predicated region
    $region98: #{energy_encoder_net_forward.1} parent=1 // pred_check
      _
    $region99: #{energy_encoder_net_forward.1} parent=1 // pred_check_branch
      %214 = sbr.rel (0) target = $region101
    $region100: #{energy_encoder_net_forward.1} parent=1 // pred_region
      %216 = dma.done [#allocation16], 512
    $region101: #{energy_encoder_net_forward.1} parent=1 // pred_fallthru
      _
    // Predicated region
    $region102: #{energy_encoder_net_forward.1} parent=1 // pred_check
      _
    $region103: #{energy_encoder_net_forward.1} parent=1 // pred_check_branch
      %218 = sbr.rel (0) target = $region105
    $region104: #{energy_encoder_net_forward.1} parent=1 // pred_region
      %220 = dma.done [#allocation19], 16
    $region105: #{energy_encoder_net_forward.1} parent=1 // pred_fallthru
      _
    // Predicated region
    $region106: #{energy_encoder_net_forward.1} parent=1 // pred_check
      _
    $region107: #{energy_encoder_net_forward.1} parent=1 // pred_check_branch
      %222 = sbr.rel (0) target = $region109
    $region108: #{energy_encoder_net_forward.1} parent=1 // pred_region
      %224 = dma.done [#allocation19], 512
    $region109: #{energy_encoder_net_forward.1} parent=1 // pred_fallthru
      _
    // Predicated region
    $region110: #{energy_encoder_net_forward.1} parent=1 // pred_check
      _
    $region111: #{energy_encoder_net_forward.1} parent=1 // pred_check_branch
      %226 = sbr.rel (0) target = $region113
    $region112: #{energy_encoder_net_forward.1} parent=1 // pred_region
      %228 = dma.done [#allocation22], 16
    $region113: #{energy_encoder_net_forward.1} parent=1 // pred_fallthru
      _
    %v229 = vld [vmem:[%s0] sm:$0xff]
    %v230 = vld [vmem:[%s0 + $0x8] sm:$0xff]
    %v231 = vld [vmem:[#allocation6] sm:$0xf]
    %v232 = vld [vmem:[#allocation8] sm:$0x1]
    %v234 = vperm.slane %v232, 0
    %vm236 = vcmask 31744
    %v238 = vsel %vm236, %v229, 0
    %v241 = vsel %vm236, %v230, 0
    %vm243 = vcmask 1043456
    %v245 = vsel %vm243, %v231, 0
    %247 = vmatpush.msra.mxu0 0.0
    %248 = vmatpush.msra.mxu0 0.0
    %249 = vmatpush.msra.mxu0 0.0
    %250 = vmatpush.msra.mxu0 0.0
    %251 = vmatpush.msra.mxu0 0.0
    %252 = vmatpush.msra.mxu0 0.0
    %253 = vmatpush.msra.mxu0 0.0
    %254 = vmatpush.msra.mxu0 0.0
    %255 = vmatpush.msra.mxu0 0.0
    %256 = vmatpush.msra.mxu0 0.0
    %257 = vmatpush.msra.mxu0 0.0
    %258 = vmatpush.msra.mxu0 0.0
    %259 = vmatpush.msra.mxu0 0.0
    %260 = vmatpush.msra.mxu0 0.0
    %261 = vmatpush.msra.mxu0 0.0
    %262 = vmatpush.msra.mxu0 %v245
    %263 = vmatmul.f32.gmra.mxu0 %v238
    %v264 = vpop.f32.mrf.mxu0
    %v265 = vadd.f32 %v234, %v264
    %266 = vmatmul.f32.gmra.mxu0 %v241
    %v267 = vpop.f32.mrf.mxu0
    %v268 = vadd.f32 %v234, %v267
    %269 = vdwg.mxu0
    %v270 = vld [vmem:[%s3] sm:$0xff]
    %v271 = vld [vmem:[%s3 + $0x8] sm:$0xff]
    %v272 = vld [vmem:[%s3 + $0x10] sm:$0xff]
    %v273 = vld [vmem:[%s3 + $0x18] sm:$0xff]
    %v274 = vld [vmem:[#allocation9] sm:$0x1]
    %v275 = vld [vmem:[#allocation3] sm:$0x3]
    %v277 = vperm.slane %v274, 0
    %vm279 = vcmask 261120
    %v281 = vsel %vm279, %v275, 0
    %283 = vmatpush.msra.mxu0 0.0
    %284 = vmatpush.msra.mxu0 0.0
    %285 = vmatpush.msra.mxu0 0.0
    %286 = vmatpush.msra.mxu0 0.0
    %287 = vmatpush.msra.mxu0 0.0
    %288 = vmatpush.msra.mxu0 0.0
    %289 = vmatpush.msra.mxu0 0.0
    %290 = vmatpush.msra.mxu0 0.0
    %291 = vmatpush.msra.mxu0 0.0
    %292 = vmatpush.msra.mxu0 0.0
    %293 = vmatpush.msra.mxu0 0.0
    %294 = vmatpush.msra.mxu0 0.0
    %295 = vmatpush.msra.mxu0 %v273
    %296 = vmatpush.msra.mxu0 %v272
    %297 = vmatpush.msra.mxu0 %v271
    %298 = vmatpush.msra.mxu0 %v270
    %299 = vmatmul.f32.gmra.mxu0 %v281
    %v300 = vpop.f32.mrf.mxu0
    %v301 = vadd.f32 %v277, %v300
    %302 = vdwg.mxu0
    %v303 = vadd.f32 %v265, %v301
    %v304 = vxor.u32 %v303, 2147483648
    %v305 = vmul.f32 %v304, 1.442695
    %v306 = vpow.pop %v305
    %v307 = vadd.f32 %v306, 1.0
    %v308 = vrcp.pop %v307
    %v309 = vmul.f32 %v307, %v308
    %v310 = vsub.f32 1.0, %v309
    %v311 = vmul.f32 %v308, %v310
    %v312 = vadd.f32 %v308, %v311
    %vm313 = vweird.f32 %v307
    %vm314 = vweird.f32 %v308
    %vm315 = vmor %vm313, %vm314
    %v316 = vsel %vm315, %v308, %v312
    %v317 = vand.u32 2147483647, %v307
    %vm318 = vcmp.eq.f32.partialorder %v317, 8.507059e+37
    %v319 = vand.u32 %v307, 2147483648
    %v320 = vor.u32 1.1754944e-38, %v319
    %v321 = vsel %vm318, %v320, %v316
    %v322 = vmul.f32 1.0, %v321
    %324 = vrot.lane.b32.xlu0 %v301, 64
    %v325 = vpop.permute.xlu0 %324
    %v327 = vmul.f32 %v322, %v325
    %329 = vrot.lane.b32.xlu0 %v327, 64
    %v330 = vpop.permute.xlu0 %329
    %v332 = vadd.f32 %v265, %v330
    %v333 = vtanh.pop %v332
    %v334 = vsub.f32 1.0, %v322
    %336 = vrot.lane.b32.xlu0 %v333, 96
    %v337 = vpop.permute.xlu0 %336
    %v339 = vmul.f32 %v334, %v337
    %340 = vrot.lane.b32.xlu0 %v275, 32
    %v341 = vpop.permute.xlu0 %340
    %v343 = vmul.f32 %v322, %v341
    %v344 = vadd.f32 %v339, %v343
    %346 = vrot.lane.b32.xlu0 %v344, 96
    %v347 = vpop.permute.xlu0 %346
    %vm349 = vcmask 254976
    %350 = vst.msk [vmem:[#allocation2] sm:$0x3] %vm349, %v347
    %v351 = vsel %vm279, %v347, 0
    %353 = vmatpush.msra.mxu0 0.0
    %354 = vmatpush.msra.mxu0 0.0
    %355 = vmatpush.msra.mxu0 0.0
    %356 = vmatpush.msra.mxu0 0.0
    %357 = vmatpush.msra.mxu0 0.0
    %358 = vmatpush.msra.mxu0 0.0
    %359 = vmatpush.msra.mxu0 0.0
    %360 = vmatpush.msra.mxu0 0.0
    %361 = vmatpush.msra.mxu0 0.0
    %362 = vmatpush.msra.mxu0 0.0
    %363 = vmatpush.msra.mxu0 0.0
    %364 = vmatpush.msra.mxu0 0.0
    %365 = vmatpush.msra.mxu0 %v273
    %366 = vmatpush.msra.mxu0 %v272
    %367 = vmatpush.msra.mxu0 %v271
    %368 = vmatpush.msra.mxu0 %v270
    %369 = vmatmul.f32.gmra.mxu0 %v351
    %v370 = vpop.f32.mrf.mxu0
    %v371 = vadd.f32 %v277, %v370
    %372 = vdwg.mxu0
    %v374 = vrot.slane %v371, 6
    %v376 = vadd.f32 %v265, %v374
    %v377 = vxor.u32 %v376, 2147483648
    %v378 = vmul.f32 %v377, 1.442695
    %v379 = vpow.pop %v378
    %v380 = vadd.f32 %v379, 1.0
    %v381 = vrcp.pop %v380
    %v382 = vmul.f32 %v380, %v381
    %v383 = vsub.f32 1.0, %v382
    %v384 = vmul.f32 %v381, %v383
    %v385 = vadd.f32 %v381, %v384
    %vm386 = vweird.f32 %v380
    %vm387 = vweird.f32 %v381
    %vm388 = vmor %vm386, %vm387
    %v389 = vsel %vm388, %v381, %v385
    %v390 = vand.u32 2147483647, %v380
    %vm391 = vcmp.eq.f32.partialorder %v390, 8.507059e+37
    %v392 = vand.u32 %v380, 2147483648
    %v393 = vor.u32 1.1754944e-38, %v392
    %v394 = vsel %vm391, %v393, %v389
    %v395 = vmul.f32 1.0, %v394
    %396 = vrot.lane.b32.xlu0 %v374, 64
    %v397 = vpop.permute.xlu0 %396
    %v399 = vmul.f32 %v395, %v397
    %401 = vrot.lane.b32.xlu0 %v399, 64
    %v402 = vpop.permute.xlu0 %401
    %v404 = vadd.f32 %v265, %v402
    %v405 = vtanh.pop %v404
    %v406 = vsub.f32 1.0, %v395
    %408 = vrot.lane.b32.xlu0 %v405, 96
    %v409 = vpop.permute.xlu0 %408
    %v411 = vmul.f32 %v406, %v409
    %v412 = vrot.slane %v344, 6
    %v414 = vmul.f32 %v395, %v412
    %v415 = vadd.f32 %v411, %v414
    %417 = vrot.lane.b32.xlu0 %v415, 96
    %v418 = vpop.permute.xlu0 %417
    %vm420 = vcmask 257026
    %421 = vst.msk [vmem:[#allocation2] sm:$0xc] %vm420, %v418
    %v422 = vrot.slane %v415, 2
    %423 = vrot.lane.b32.xlu0 %v422, 96
    %v424 = vpop.permute.xlu0 %423
    %v425 = vsel %vm279, %v424, 0
    %427 = vmatpush.msra.mxu0 0.0
    %428 = vmatpush.msra.mxu0 0.0
    %429 = vmatpush.msra.mxu0 0.0
    %430 = vmatpush.msra.mxu0 0.0
    %431 = vmatpush.msra.mxu0 0.0
    %432 = vmatpush.msra.mxu0 0.0
    %433 = vmatpush.msra.mxu0 0.0
    %434 = vmatpush.msra.mxu0 0.0
    %435 = vmatpush.msra.mxu0 0.0
    %436 = vmatpush.msra.mxu0 0.0
    %437 = vmatpush.msra.mxu0 0.0
    %438 = vmatpush.msra.mxu0 0.0
    %439 = vmatpush.msra.mxu0 %v273
    %440 = vmatpush.msra.mxu0 %v272
    %441 = vmatpush.msra.mxu0 %v271
    %442 = vmatpush.msra.mxu0 %v270
    %443 = vmatmul.f32.gmra.mxu0 %v425
    %v444 = vpop.f32.mrf.mxu0
    %v445 = vadd.f32 %v277, %v444
    %446 = vdwg.mxu0
    %v448 = vrot.slane %v445, 4
    %v450 = vadd.f32 %v265, %v448
    %v451 = vxor.u32 %v450, 2147483648
    %v452 = vmul.f32 %v451, 1.442695
    %v453 = vpow.pop %v452
    %v454 = vadd.f32 %v453, 1.0
    %v455 = vrcp.pop %v454
    %v456 = vmul.f32 %v454, %v455
    %v457 = vsub.f32 1.0, %v456
    %v458 = vmul.f32 %v455, %v457
    %v459 = vadd.f32 %v455, %v458
    %vm460 = vweird.f32 %v454
    %vm461 = vweird.f32 %v455
    %vm462 = vmor %vm460, %vm461
    %v463 = vsel %vm462, %v455, %v459
    %v464 = vand.u32 2147483647, %v454
    %vm465 = vcmp.eq.f32.partialorder %v464, 8.507059e+37
    %v466 = vand.u32 %v454, 2147483648
    %v467 = vor.u32 1.1754944e-38, %v466
    %v468 = vsel %vm465, %v467, %v463
    %v469 = vmul.f32 1.0, %v468
    %470 = vrot.lane.b32.xlu0 %v448, 64
    %v471 = vpop.permute.xlu0 %470
    %v473 = vmul.f32 %v469, %v471
    %475 = vrot.lane.b32.xlu0 %v473, 64
    %v476 = vpop.permute.xlu0 %475
    %v478 = vadd.f32 %v265, %v476
    %v479 = vtanh.pop %v478
    %v480 = vsub.f32 1.0, %v469
    %482 = vrot.lane.b32.xlu0 %v479, 96
    %v483 = vpop.permute.xlu0 %482
    %v485 = vmul.f32 %v480, %v483
    %v486 = vrot.slane %v415, 6
    %v488 = vmul.f32 %v469, %v486
    %v489 = vadd.f32 %v485, %v488
    %491 = vrot.lane.b32.xlu0 %v489, 96
    %v492 = vpop.permute.xlu0 %491
    %vm494 = vcmask 259076
    %495 = vst.msk [vmem:[#allocation2] sm:$0x30] %vm494, %v492
    %v496 = vrot.slane %v489, 4
    %497 = vrot.lane.b32.xlu0 %v496, 96
    %v498 = vpop.permute.xlu0 %497
    %v499 = vsel %vm279, %v498, 0
    %501 = vmatpush.msra.mxu0 0.0
    %502 = vmatpush.msra.mxu0 0.0
    %503 = vmatpush.msra.mxu0 0.0
    %504 = vmatpush.msra.mxu0 0.0
    %505 = vmatpush.msra.mxu0 0.0
    %506 = vmatpush.msra.mxu0 0.0
    %507 = vmatpush.msra.mxu0 0.0
    %508 = vmatpush.msra.mxu0 0.0
    %509 = vmatpush.msra.mxu0 0.0
    %510 = vmatpush.msra.mxu0 0.0
    %511 = vmatpush.msra.mxu0 0.0
    %512 = vmatpush.msra.mxu0 0.0
    %513 = vmatpush.msra.mxu0 %v273
    %514 = vmatpush.msra.mxu0 %v272
    %515 = vmatpush.msra.mxu0 %v271
    %516 = vmatpush.msra.mxu0 %v270
    %517 = vmatmul.f32.gmra.mxu0 %v499
    %v518 = vpop.f32.mrf.mxu0
    %v519 = vadd.f32 %v277, %v518
    %520 = vdwg.mxu0
    %v522 = vrot.slane %v519, 2
    %v524 = vadd.f32 %v265, %v522
    %v525 = vxor.u32 %v524, 2147483648
    %v526 = vmul.f32 %v525, 1.442695
    %v527 = vpow.pop %v526
    %v528 = vadd.f32 %v527, 1.0
    %v529 = vrcp.pop %v528
    %v530 = vmul.f32 %v528, %v529
    %v531 = vsub.f32 1.0, %v530
    %v532 = vmul.f32 %v529, %v531
    %v533 = vadd.f32 %v529, %v532
    %vm534 = vweird.f32 %v528
    %vm535 = vweird.f32 %v529
    %vm536 = vmor %vm534, %vm535
    %v537 = vsel %vm536, %v529, %v533
    %v538 = vand.u32 2147483647, %v528
    %vm539 = vcmp.eq.f32.partialorder %v538, 8.507059e+37
    %v540 = vand.u32 %v528, 2147483648
    %v541 = vor.u32 1.1754944e-38, %v540
    %v542 = vsel %vm539, %v541, %v537
    %v543 = vmul.f32 1.0, %v542
    %544 = vrot.lane.b32.xlu0 %v522, 64
    %v545 = vpop.permute.xlu0 %544
    %v547 = vmul.f32 %v543, %v545
    %549 = vrot.lane.b32.xlu0 %v547, 64
    %v550 = vpop.permute.xlu0 %549
    %v552 = vadd.f32 %v265, %v550
    %v553 = vtanh.pop %v552
    %v554 = vsub.f32 1.0, %v543
    %556 = vrot.lane.b32.xlu0 %v553, 96
    %v557 = vpop.permute.xlu0 %556
    %v559 = vmul.f32 %v554, %v557
    %v560 = vrot.slane %v489, 6
    %v562 = vmul.f32 %v543, %v560
    %v563 = vadd.f32 %v559, %v562
    %565 = vrot.lane.b32.xlu0 %v563, 96
    %v566 = vpop.permute.xlu0 %565
    %vm568 = vcmask 261126
    %569 = vst.msk [vmem:[#allocation2] sm:$0xc0] %vm568, %v566
    %v570 = vrot.slane %v563, 6
    %571 = vrot.lane.b32.xlu0 %v570, 96
    %v572 = vpop.permute.xlu0 %571
    %v573 = vsel %vm279, %v572, 0
    %575 = vmatpush.msra.mxu0 0.0
    %576 = vmatpush.msra.mxu0 0.0
    %577 = vmatpush.msra.mxu0 0.0
    %578 = vmatpush.msra.mxu0 0.0
    %579 = vmatpush.msra.mxu0 0.0
    %580 = vmatpush.msra.mxu0 0.0
    %581 = vmatpush.msra.mxu0 0.0
    %582 = vmatpush.msra.mxu0 0.0
    %583 = vmatpush.msra.mxu0 0.0
    %584 = vmatpush.msra.mxu0 0.0
    %585 = vmatpush.msra.mxu0 0.0
    %586 = vmatpush.msra.mxu0 0.0
    %587 = vmatpush.msra.mxu0 %v273
    %588 = vmatpush.msra.mxu0 %v272
    %589 = vmatpush.msra.mxu0 %v271
    %590 = vmatpush.msra.mxu0 %v270
    %591 = vmatmul.f32.gmra.mxu0 %v573
    %v592 = vpop.f32.mrf.mxu0
    %v593 = vadd.f32 %v277, %v592
    %594 = vdwg.mxu0
    %v595 = vadd.f32 %v268, %v593
    %v596 = vxor.u32 %v595, 2147483648
    %v597 = vmul.f32 %v596, 1.442695
    %v598 = vpow.pop %v597
    %v599 = vadd.f32 %v598, 1.0
    %v600 = vrcp.pop %v599
    %v601 = vmul.f32 %v599, %v600
    %v602 = vsub.f32 1.0, %v601
    %v603 = vmul.f32 %v600, %v602
    %v604 = vadd.f32 %v600, %v603
    %vm605 = vweird.f32 %v599
    %vm606 = vweird.f32 %v600
    %vm607 = vmor %vm605, %vm606
    %v608 = vsel %vm607, %v600, %v604
    %v609 = vand.u32 2147483647, %v599
    %vm610 = vcmp.eq.f32.partialorder %v609, 8.507059e+37
    %v611 = vand.u32 %v599, 2147483648
    %v612 = vor.u32 1.1754944e-38, %v611
    %v613 = vsel %vm610, %v612, %v608
    %v614 = vmul.f32 1.0, %v613
    %616 = vrot.lane.b32.xlu0 %v593, 64
    %v617 = vpop.permute.xlu0 %616
    %v619 = vmul.f32 %v614, %v617
    %621 = vrot.lane.b32.xlu0 %v619, 64
    %v622 = vpop.permute.xlu0 %621
    %v624 = vadd.f32 %v268, %v622
    %v625 = vtanh.pop %v624
    %v626 = vsub.f32 1.0, %v614
    %628 = vrot.lane.b32.xlu0 %v625, 96
    %v629 = vpop.permute.xlu0 %628
    %v631 = vmul.f32 %v626, %v629
    %v633 = vmul.f32 %v614, %v570
    %v634 = vadd.f32 %v631, %v633
    %636 = vrot.lane.b32.xlu0 %v634, 96
    %v637 = vpop.permute.xlu0 %636
    %639 = vst.msk [vmem:[#allocation2 + $0x8] sm:$0x3] %vm349, %v637
    %v640 = vsel %vm279, %v637, 0
    %642 = vmatpush.msra.mxu0 0.0
    %643 = vmatpush.msra.mxu0 0.0
    %644 = vmatpush.msra.mxu0 0.0
    %645 = vmatpush.msra.mxu0 0.0
    %646 = vmatpush.msra.mxu0 0.0
    %647 = vmatpush.msra.mxu0 0.0
    %648 = vmatpush.msra.mxu0 0.0
    %649 = vmatpush.msra.mxu0 0.0
    %650 = vmatpush.msra.mxu0 0.0
    %651 = vmatpush.msra.mxu0 0.0
    %652 = vmatpush.msra.mxu0 0.0
    %653 = vmatpush.msra.mxu0 0.0
    %654 = vmatpush.msra.mxu0 %v273
    %655 = vmatpush.msra.mxu0 %v272
    %656 = vmatpush.msra.mxu0 %v271
    %657 = vmatpush.msra.mxu0 %v270
    %658 = vmatmul.f32.gmra.mxu0 %v640
    %v659 = vpop.f32.mrf.mxu0
    %v660 = vadd.f32 %v277, %v659
    %661 = vdwg.mxu0
    %v663 = vrot.slane %v660, 6
    %v665 = vadd.f32 %v268, %v663
    %v666 = vxor.u32 %v665, 2147483648
    %v667 = vmul.f32 %v666, 1.442695
    %v668 = vpow.pop %v667
    %v669 = vadd.f32 %v668, 1.0
    %v670 = vrcp.pop %v669
    %v671 = vmul.f32 %v669, %v670
    %v672 = vsub.f32 1.0, %v671
    %v673 = vmul.f32 %v670, %v672
    %v674 = vadd.f32 %v670, %v673
    %vm675 = vweird.f32 %v669
    %vm676 = vweird.f32 %v670
    %vm677 = vmor %vm675, %vm676
    %v678 = vsel %vm677, %v670, %v674
    %v679 = vand.u32 2147483647, %v669
    %vm680 = vcmp.eq.f32.partialorder %v679, 8.507059e+37
    %v681 = vand.u32 %v669, 2147483648
    %v682 = vor.u32 1.1754944e-38, %v681
    %v683 = vsel %vm680, %v682, %v678
    %v684 = vmul.f32 1.0, %v683
    %685 = vrot.lane.b32.xlu0 %v663, 64
    %v686 = vpop.permute.xlu0 %685
    %v688 = vmul.f32 %v684, %v686
    %690 = vrot.lane.b32.xlu0 %v688, 64
    %v691 = vpop.permute.xlu0 %690
    %v693 = vadd.f32 %v268, %v691
    %v694 = vtanh.pop %v693
    %v695 = vsub.f32 1.0, %v684
    %697 = vrot.lane.b32.xlu0 %v694, 96
    %v698 = vpop.permute.xlu0 %697
    %v700 = vmul.f32 %v695, %v698
    %v701 = vrot.slane %v634, 6
    %v703 = vmul.f32 %v684, %v701
    %v704 = vadd.f32 %v700, %v703
    %706 = vrot.lane.b32.xlu0 %v704, 96
    %v707 = vpop.permute.xlu0 %706
    %709 = vst.msk [vmem:[#allocation2 + $0x8] sm:$0xc] %vm420, %v707
    %v710 = vrot.slane %v704, 2
    %711 = vrot.lane.b32.xlu0 %v710, 96
    %v712 = vpop.permute.xlu0 %711
    %v713 = vsel %vm279, %v712, 0
    %715 = vmatpush.msra.mxu0 0.0
    %716 = vmatpush.msra.mxu0 0.0
    %717 = vmatpush.msra.mxu0 0.0
    %718 = vmatpush.msra.mxu0 0.0
    %719 = vmatpush.msra.mxu0 0.0
    %720 = vmatpush.msra.mxu0 0.0
    %721 = vmatpush.msra.mxu0 0.0
    %722 = vmatpush.msra.mxu0 0.0
    %723 = vmatpush.msra.mxu0 0.0
    %724 = vmatpush.msra.mxu0 0.0
    %725 = vmatpush.msra.mxu0 0.0
    %726 = vmatpush.msra.mxu0 0.0
    %727 = vmatpush.msra.mxu0 %v273
    %728 = vmatpush.msra.mxu0 %v272
    %729 = vmatpush.msra.mxu0 %v271
    %730 = vmatpush.msra.mxu0 %v270
    %731 = vmatmul.f32.gmra.mxu0 %v713
    %v732 = vpop.f32.mrf.mxu0
    %v733 = vadd.f32 %v277, %v732
    %734 = vdwg.mxu0
    %v736 = vrot.slane %v733, 4
    %v738 = vadd.f32 %v268, %v736
    %v739 = vxor.u32 %v738, 2147483648
    %v740 = vmul.f32 %v739, 1.442695
    %v741 = vpow.pop %v740
    %v742 = vadd.f32 %v741, 1.0
    %v743 = vrcp.pop %v742
    %v744 = vmul.f32 %v742, %v743
    %v745 = vsub.f32 1.0, %v744
    %v746 = vmul.f32 %v743, %v745
    %v747 = vadd.f32 %v743, %v746
    %vm748 = vweird.f32 %v742
    %vm749 = vweird.f32 %v743
    %vm750 = vmor %vm748, %vm749
    %v751 = vsel %vm750, %v743, %v747
    %v752 = vand.u32 2147483647, %v742
    %vm753 = vcmp.eq.f32.partialorder %v752, 8.507059e+37
    %v754 = vand.u32 %v742, 2147483648
    %v755 = vor.u32 1.1754944e-38, %v754
    %v756 = vsel %vm753, %v755, %v751
    %v757 = vmul.f32 1.0, %v756
    %758 = vrot.lane.b32.xlu0 %v736, 64
    %v759 = vpop.permute.xlu0 %758
    %v761 = vmul.f32 %v757, %v759
    %763 = vrot.lane.b32.xlu0 %v761, 64
    %v764 = vpop.permute.xlu0 %763
    %v766 = vadd.f32 %v268, %v764
    %v767 = vtanh.pop %v766
    %v768 = vsub.f32 1.0, %v757
    %770 = vrot.lane.b32.xlu0 %v767, 96
    %v771 = vpop.permute.xlu0 %770
    %v773 = vmul.f32 %v768, %v771
    %v774 = vrot.slane %v704, 6
    %v776 = vmul.f32 %v757, %v774
    %v777 = vadd.f32 %v773, %v776
    %779 = vrot.lane.b32.xlu0 %v777, 96
    %v780 = vpop.permute.xlu0 %779
    %782 = vst.msk [vmem:[#allocation2 + $0x8] sm:$0x30] %vm494, %v780
    %v783 = vrot.slane %v777, 4
    %784 = vrot.lane.b32.xlu0 %v783, 96
    %v785 = vpop.permute.xlu0 %784
    %v786 = vsel %vm279, %v785, 0
    %788 = vmatpush.msra.mxu0 0.0
    %789 = vmatpush.msra.mxu0 0.0
    %790 = vmatpush.msra.mxu0 0.0
    %791 = vmatpush.msra.mxu0 0.0
    %792 = vmatpush.msra.mxu0 0.0
    %793 = vmatpush.msra.mxu0 0.0
    %794 = vmatpush.msra.mxu0 0.0
    %795 = vmatpush.msra.mxu0 0.0
    %796 = vmatpush.msra.mxu0 0.0
    %797 = vmatpush.msra.mxu0 0.0
    %798 = vmatpush.msra.mxu0 0.0
    %799 = vmatpush.msra.mxu0 0.0
    %800 = vmatpush.msra.mxu0 %v273
    %801 = vmatpush.msra.mxu0 %v272
    %802 = vmatpush.msra.mxu0 %v271
    %803 = vmatpush.msra.mxu0 %v270
    %804 = vmatmul.f32.gmra.mxu0 %v786
    %v805 = vpop.f32.mrf.mxu0
    %v806 = vadd.f32 %v277, %v805
    %807 = vdwg.mxu0
    %v809 = vrot.slane %v806, 2
    %v811 = vadd.f32 %v268, %v809
    %v812 = vxor.u32 %v811, 2147483648
    %v813 = vmul.f32 %v812, 1.442695
    %v814 = vpow.pop %v813
    %v815 = vadd.f32 %v814, 1.0
    %v816 = vrcp.pop %v815
    %v817 = vmul.f32 %v815, %v816
    %v818 = vsub.f32 1.0, %v817
    %v819 = vmul.f32 %v816, %v818
    %v820 = vadd.f32 %v816, %v819
    %vm821 = vweird.f32 %v815
    %vm822 = vweird.f32 %v816
    %vm823 = vmor %vm821, %vm822
    %v824 = vsel %vm823, %v816, %v820
    %v825 = vand.u32 2147483647, %v815
    %vm826 = vcmp.eq.f32.partialorder %v825, 8.507059e+37
    %v827 = vand.u32 %v815, 2147483648
    %v828 = vor.u32 1.1754944e-38, %v827
    %v829 = vsel %vm826, %v828, %v824
    %v830 = vmul.f32 1.0, %v829
    %831 = vrot.lane.b32.xlu0 %v809, 64
    %v832 = vpop.permute.xlu0 %831
    %v834 = vmul.f32 %v830, %v832
    %836 = vrot.lane.b32.xlu0 %v834, 64
    %v837 = vpop.permute.xlu0 %836
    %v839 = vadd.f32 %v268, %v837
    %v840 = vtanh.pop %v839
    %v841 = vsub.f32 1.0, %v830
    %843 = vrot.lane.b32.xlu0 %v840, 96
    %v844 = vpop.permute.xlu0 %843
    %v846 = vmul.f32 %v841, %v844
    %v847 = vrot.slane %v777, 6
    %v849 = vmul.f32 %v830, %v847
    %v850 = vadd.f32 %v846, %v849
    %852 = vrot.lane.b32.xlu0 %v850, 96
    %v853 = vpop.permute.xlu0 %852
    %855 = vst.msk [vmem:[#allocation2 + $0x8] sm:$0xc0] %vm568, %v853
    %v856 = vld [vmem:[#allocation2] sm:$0xff]
    %v857 = vld [vmem:[#allocation2 + $0x8] sm:$0xff]
    %v858 = vld [vmem:[#allocation11] sm:$0xff]
    %v859 = vld [vmem:[#allocation11 + $0x8] sm:$0xff]
    %v860 = vld [vmem:[#allocation11 + $0x10] sm:$0xff]
    %v861 = vld [vmem:[#allocation11 + $0x18] sm:$0xff]
    %v862 = vld [vmem:[%s8] sm:$0x1]
    %v864 = vperm.slane %v862, 0
    %v867 = vsel %vm279, %v856, 0
    %v870 = vsel %vm279, %v857, 0
    %872 = vmatpush.msra.mxu0 0.0
    %873 = vmatpush.msra.mxu0 0.0
    %874 = vmatpush.msra.mxu0 0.0
    %875 = vmatpush.msra.mxu0 0.0
    %876 = vmatpush.msra.mxu0 0.0
    %877 = vmatpush.msra.mxu0 0.0
    %878 = vmatpush.msra.mxu0 0.0
    %879 = vmatpush.msra.mxu0 0.0
    %880 = vmatpush.msra.mxu0 0.0
    %881 = vmatpush.msra.mxu0 0.0
    %882 = vmatpush.msra.mxu0 0.0
    %883 = vmatpush.msra.mxu0 0.0
    %884 = vmatpush.msra.mxu0 %v861
    %885 = vmatpush.msra.mxu0 %v860
    %886 = vmatpush.msra.mxu0 %v859
    %887 = vmatpush.msra.mxu0 %v858
    %888 = vmatmul.f32.gmra.mxu0 %v867
    %v889 = vpop.f32.mrf.mxu0
    %v890 = vadd.f32 %v864, %v889
    %891 = vmatmul.f32.gmra.mxu0 %v870
    %v892 = vpop.f32.mrf.mxu0
    %v893 = vadd.f32 %v864, %v892
    %894 = vdwg.mxu0
    %v895 = vld [vmem:[#allocation12] sm:$0xff]
    %v896 = vld [vmem:[#allocation12 + $0x8] sm:$0xff]
    %v897 = vld [vmem:[#allocation12 + $0x10] sm:$0xff]
    %v898 = vld [vmem:[#allocation12 + $0x18] sm:$0xff]
    %v899 = vld [vmem:[%s9] sm:$0x1]
    %s900 = scalar_lea.vmem [#allocation3], 2
    %v901 = vld [vmem:[%s900] sm:$0x3]
    %v903 = vperm.slane %v899, 0
    %v906 = vsel %vm279, %v901, 0
    %908 = vmatpush.msra.mxu0 0.0
    %909 = vmatpush.msra.mxu0 0.0
    %910 = vmatpush.msra.mxu0 0.0
    %911 = vmatpush.msra.mxu0 0.0
    %912 = vmatpush.msra.mxu0 0.0
    %913 = vmatpush.msra.mxu0 0.0
    %914 = vmatpush.msra.mxu0 0.0
    %915 = vmatpush.msra.mxu0 0.0
    %916 = vmatpush.msra.mxu0 0.0
    %917 = vmatpush.msra.mxu0 0.0
    %918 = vmatpush.msra.mxu0 0.0
    %919 = vmatpush.msra.mxu0 0.0
    %920 = vmatpush.msra.mxu0 %v898
    %921 = vmatpush.msra.mxu0 %v897
    %922 = vmatpush.msra.mxu0 %v896
    %923 = vmatpush.msra.mxu0 %v895
    %924 = vmatmul.f32.gmra.mxu0 %v906
    %v925 = vpop.f32.mrf.mxu0
    %v926 = vadd.f32 %v903, %v925
    %927 = vdwg.mxu0
    %v928 = vadd.f32 %v890, %v926
    %v929 = vxor.u32 %v928, 2147483648
    %v930 = vmul.f32 %v929, 1.442695
    %v931 = vpow.pop %v930
    %v932 = vadd.f32 %v931, 1.0
    %v933 = vrcp.pop %v932
    %v934 = vmul.f32 %v932, %v933
    %v935 = vsub.f32 1.0, %v934
    %v936 = vmul.f32 %v933, %v935
    %v937 = vadd.f32 %v933, %v936
    %vm938 = vweird.f32 %v932
    %vm939 = vweird.f32 %v933
    %vm940 = vmor %vm938, %vm939
    %v941 = vsel %vm940, %v933, %v937
    %v942 = vand.u32 2147483647, %v932
    %vm943 = vcmp.eq.f32.partialorder %v942, 8.507059e+37
    %v944 = vand.u32 %v932, 2147483648
    %v945 = vor.u32 1.1754944e-38, %v944
    %v946 = vsel %vm943, %v945, %v941
    %v947 = vmul.f32 1.0, %v946
    %949 = vrot.lane.b32.xlu0 %v926, 64
    %v950 = vpop.permute.xlu0 %949
    %v952 = vmul.f32 %v947, %v950
    %954 = vrot.lane.b32.xlu0 %v952, 64
    %v955 = vpop.permute.xlu0 %954
    %v957 = vadd.f32 %v890, %v955
    %v958 = vtanh.pop %v957
    %v959 = vsub.f32 1.0, %v947
    %961 = vrot.lane.b32.xlu0 %v958, 96
    %v962 = vpop.permute.xlu0 %961
    %v964 = vmul.f32 %v959, %v962
    %965 = vrot.lane.b32.xlu0 %v901, 32
    %v966 = vpop.permute.xlu0 %965
    %v968 = vmul.f32 %v947, %v966
    %v969 = vadd.f32 %v964, %v968
    %971 = vrot.lane.b32.xlu0 %v969, 96
    %v972 = vpop.permute.xlu0 %971
    %v973 = vsel %vm279, %v972, 0
    %975 = vmatpush.msra.mxu0 0.0
    %976 = vmatpush.msra.mxu0 0.0
    %977 = vmatpush.msra.mxu0 0.0
    %978 = vmatpush.msra.mxu0 0.0
    %979 = vmatpush.msra.mxu0 0.0
    %980 = vmatpush.msra.mxu0 0.0
    %981 = vmatpush.msra.mxu0 0.0
    %982 = vmatpush.msra.mxu0 0.0
    %983 = vmatpush.msra.mxu0 0.0
    %984 = vmatpush.msra.mxu0 0.0
    %985 = vmatpush.msra.mxu0 0.0
    %986 = vmatpush.msra.mxu0 0.0
    %987 = vmatpush.msra.mxu0 %v898
    %988 = vmatpush.msra.mxu0 %v897
    %989 = vmatpush.msra.mxu0 %v896
    %990 = vmatpush.msra.mxu0 %v895
    %991 = vmatmul.f32.gmra.mxu0 %v973
    %v992 = vpop.f32.mrf.mxu0
    %v993 = vadd.f32 %v903, %v992
    %994 = vdwg.mxu0
    %v996 = vrot.slane %v993, 6
    %v998 = vadd.f32 %v890, %v996
    %v999 = vxor.u32 %v998, 2147483648
    %v1000 = vmul.f32 %v999, 1.442695
    %v1001 = vpow.pop %v1000
    %v1002 = vadd.f32 %v1001, 1.0
    %v1003 = vrcp.pop %v1002
    %v1004 = vmul.f32 %v1002, %v1003
    %v1005 = vsub.f32 1.0, %v1004
    %v1006 = vmul.f32 %v1003, %v1005
    %v1007 = vadd.f32 %v1003, %v1006
    %vm1008 = vweird.f32 %v1002
    %vm1009 = vweird.f32 %v1003
    %vm1010 = vmor %vm1008, %vm1009
    %v1011 = vsel %vm1010, %v1003, %v1007
    %v1012 = vand.u32 2147483647, %v1002
    %vm1013 = vcmp.eq.f32.partialorder %v1012, 8.507059e+37
    %v1014 = vand.u32 %v1002, 2147483648
    %v1015 = vor.u32 1.1754944e-38, %v1014
    %v1016 = vsel %vm1013, %v1015, %v1011
    %v1017 = vmul.f32 1.0, %v1016
    %1018 = vrot.lane.b32.xlu0 %v996, 64
    %v1019 = vpop.permute.xlu0 %1018
    %v1021 = vmul.f32 %v1017, %v1019
    %1023 = vrot.lane.b32.xlu0 %v1021, 64
    %v1024 = vpop.permute.xlu0 %1023
    %v1026 = vadd.f32 %v890, %v1024
    %v1027 = vtanh.pop %v1026
    %v1028 = vsub.f32 1.0, %v1017
    %1030 = vrot.lane.b32.xlu0 %v1027, 96
    %v1031 = vpop.permute.xlu0 %1030
    %v1033 = vmul.f32 %v1028, %v1031
    %v1034 = vrot.slane %v969, 6
    %v1036 = vmul.f32 %v1017, %v1034
    %v1037 = vadd.f32 %v1033, %v1036
    %v1039 = vrot.slane %v1037, 2
    %1040 = vrot.lane.b32.xlu0 %v1039, 96
    %v1041 = vpop.permute.xlu0 %1040
    %v1042 = vsel %vm279, %v1041, 0
    %1044 = vmatpush.msra.mxu0 0.0
    %1045 = vmatpush.msra.mxu0 0.0
    %1046 = vmatpush.msra.mxu0 0.0
    %1047 = vmatpush.msra.mxu0 0.0
    %1048 = vmatpush.msra.mxu0 0.0
    %1049 = vmatpush.msra.mxu0 0.0
    %1050 = vmatpush.msra.mxu0 0.0
    %1051 = vmatpush.msra.mxu0 0.0
    %1052 = vmatpush.msra.mxu0 0.0
    %1053 = vmatpush.msra.mxu0 0.0
    %1054 = vmatpush.msra.mxu0 0.0
    %1055 = vmatpush.msra.mxu0 0.0
    %1056 = vmatpush.msra.mxu0 %v898
    %1057 = vmatpush.msra.mxu0 %v897
    %1058 = vmatpush.msra.mxu0 %v896
    %1059 = vmatpush.msra.mxu0 %v895
    %1060 = vmatmul.f32.gmra.mxu0 %v1042
    %v1061 = vpop.f32.mrf.mxu0
    %v1062 = vadd.f32 %v903, %v1061
    %1063 = vdwg.mxu0
    %v1065 = vrot.slane %v1062, 4
    %v1067 = vadd.f32 %v890, %v1065
    %v1068 = vxor.u32 %v1067, 2147483648
    %v1069 = vmul.f32 %v1068, 1.442695
    %v1070 = vpow.pop %v1069
    %v1071 = vadd.f32 %v1070, 1.0
    %v1072 = vrcp.pop %v1071
    %v1073 = vmul.f32 %v1071, %v1072
    %v1074 = vsub.f32 1.0, %v1073
    %v1075 = vmul.f32 %v1072, %v1074
    %v1076 = vadd.f32 %v1072, %v1075
    %vm1077 = vweird.f32 %v1071
    %vm1078 = vweird.f32 %v1072
    %vm1079 = vmor %vm1077, %vm1078
    %v1080 = vsel %vm1079, %v1072, %v1076
    %v1081 = vand.u32 2147483647, %v1071
    %vm1082 = vcmp.eq.f32.partialorder %v1081, 8.507059e+37
    %v1083 = vand.u32 %v1071, 2147483648
    %v1084 = vor.u32 1.1754944e-38, %v1083
    %v1085 = vsel %vm1082, %v1084, %v1080
    %v1086 = vmul.f32 1.0, %v1085
    %1087 = vrot.lane.b32.xlu0 %v1065, 64
    %v1088 = vpop.permute.xlu0 %1087
    %v1090 = vmul.f32 %v1086, %v1088
    %1092 = vrot.lane.b32.xlu0 %v1090, 64
    %v1093 = vpop.permute.xlu0 %1092
    %v1095 = vadd.f32 %v890, %v1093
    %v1096 = vtanh.pop %v1095
    %v1097 = vsub.f32 1.0, %v1086
    %1099 = vrot.lane.b32.xlu0 %v1096, 96
    %v1100 = vpop.permute.xlu0 %1099
    %v1102 = vmul.f32 %v1097, %v1100
    %v1103 = vrot.slane %v1037, 6
    %v1105 = vmul.f32 %v1086, %v1103
    %v1106 = vadd.f32 %v1102, %v1105
    %v1108 = vrot.slane %v1106, 4
    %1109 = vrot.lane.b32.xlu0 %v1108, 96
    %v1110 = vpop.permute.xlu0 %1109
    %v1111 = vsel %vm279, %v1110, 0
    %1113 = vmatpush.msra.mxu0 0.0
    %1114 = vmatpush.msra.mxu0 0.0
    %1115 = vmatpush.msra.mxu0 0.0
    %1116 = vmatpush.msra.mxu0 0.0
    %1117 = vmatpush.msra.mxu0 0.0
    %1118 = vmatpush.msra.mxu0 0.0
    %1119 = vmatpush.msra.mxu0 0.0
    %1120 = vmatpush.msra.mxu0 0.0
    %1121 = vmatpush.msra.mxu0 0.0
    %1122 = vmatpush.msra.mxu0 0.0
    %1123 = vmatpush.msra.mxu0 0.0
    %1124 = vmatpush.msra.mxu0 0.0
    %1125 = vmatpush.msra.mxu0 %v898
    %1126 = vmatpush.msra.mxu0 %v897
    %1127 = vmatpush.msra.mxu0 %v896
    %1128 = vmatpush.msra.mxu0 %v895
    %1129 = vmatmul.f32.gmra.mxu0 %v1111
    %v1130 = vpop.f32.mrf.mxu0
    %v1131 = vadd.f32 %v903, %v1130
    %1132 = vdwg.mxu0
    %v1134 = vrot.slane %v1131, 2
    %v1136 = vadd.f32 %v890, %v1134
    %v1137 = vxor.u32 %v1136, 2147483648
    %v1138 = vmul.f32 %v1137, 1.442695
    %v1139 = vpow.pop %v1138
    %v1140 = vadd.f32 %v1139, 1.0
    %v1141 = vrcp.pop %v1140
    %v1142 = vmul.f32 %v1140, %v1141
    %v1143 = vsub.f32 1.0, %v1142
    %v1144 = vmul.f32 %v1141, %v1143
    %v1145 = vadd.f32 %v1141, %v1144
    %vm1146 = vweird.f32 %v1140
    %vm1147 = vweird.f32 %v1141
    %vm1148 = vmor %vm1146, %vm1147
    %v1149 = vsel %vm1148, %v1141, %v1145
    %v1150 = vand.u32 2147483647, %v1140
    %vm1151 = vcmp.eq.f32.partialorder %v1150, 8.507059e+37
    %v1152 = vand.u32 %v1140, 2147483648
    %v1153 = vor.u32 1.1754944e-38, %v1152
    %v1154 = vsel %vm1151, %v1153, %v1149
    %v1155 = vmul.f32 1.0, %v1154
    %1156 = vrot.lane.b32.xlu0 %v1134, 64
    %v1157 = vpop.permute.xlu0 %1156
    %v1159 = vmul.f32 %v1155, %v1157
    %1161 = vrot.lane.b32.xlu0 %v1159, 64
    %v1162 = vpop.permute.xlu0 %1161
    %v1164 = vadd.f32 %v890, %v1162
    %v1165 = vtanh.pop %v1164
    %v1166 = vsub.f32 1.0, %v1155
    %1168 = vrot.lane.b32.xlu0 %v1165, 96
    %v1169 = vpop.permute.xlu0 %1168
    %v1171 = vmul.f32 %v1166, %v1169
    %v1172 = vrot.slane %v1106, 6
    %v1174 = vmul.f32 %v1155, %v1172
    %v1175 = vadd.f32 %v1171, %v1174
    %v1177 = vrot.slane %v1175, 6
    %1178 = vrot.lane.b32.xlu0 %v1177, 96
    %v1179 = vpop.permute.xlu0 %1178
    %v1180 = vsel %vm279, %v1179, 0
    %1182 = vmatpush.msra.mxu0 0.0
    %1183 = vmatpush.msra.mxu0 0.0
    %1184 = vmatpush.msra.mxu0 0.0
    %1185 = vmatpush.msra.mxu0 0.0
    %1186 = vmatpush.msra.mxu0 0.0
    %1187 = vmatpush.msra.mxu0 0.0
    %1188 = vmatpush.msra.mxu0 0.0
    %1189 = vmatpush.msra.mxu0 0.0
    %1190 = vmatpush.msra.mxu0 0.0
    %1191 = vmatpush.msra.mxu0 0.0
    %1192 = vmatpush.msra.mxu0 0.0
    %1193 = vmatpush.msra.mxu0 0.0
    %1194 = vmatpush.msra.mxu0 %v898
    %1195 = vmatpush.msra.mxu0 %v897
    %1196 = vmatpush.msra.mxu0 %v896
    %1197 = vmatpush.msra.mxu0 %v895
    %1198 = vmatmul.f32.gmra.mxu0 %v1180
    %v1199 = vpop.f32.mrf.mxu0
    %v1200 = vadd.f32 %v903, %v1199
    %1201 = vdwg.mxu0
    %v1202 = vadd.f32 %v893, %v1200
    %v1203 = vxor.u32 %v1202, 2147483648
    %v1204 = vmul.f32 %v1203, 1.442695
    %v1205 = vpow.pop %v1204
    %v1206 = vadd.f32 %v1205, 1.0
    %v1207 = vrcp.pop %v1206
    %v1208 = vmul.f32 %v1206, %v1207
    %v1209 = vsub.f32 1.0, %v1208
    %v1210 = vmul.f32 %v1207, %v1209
    %v1211 = vadd.f32 %v1207, %v1210
    %vm1212 = vweird.f32 %v1206
    %vm1213 = vweird.f32 %v1207
    %vm1214 = vmor %vm1212, %vm1213
    %v1215 = vsel %vm1214, %v1207, %v1211
    %v1216 = vand.u32 2147483647, %v1206
    %vm1217 = vcmp.eq.f32.partialorder %v1216, 8.507059e+37
    %v1218 = vand.u32 %v1206, 2147483648
    %v1219 = vor.u32 1.1754944e-38, %v1218
    %v1220 = vsel %vm1217, %v1219, %v1215
    %v1221 = vmul.f32 1.0, %v1220
    %1223 = vrot.lane.b32.xlu0 %v1200, 64
    %v1224 = vpop.permute.xlu0 %1223
    %v1226 = vmul.f32 %v1221, %v1224
    %1228 = vrot.lane.b32.xlu0 %v1226, 64
    %v1229 = vpop.permute.xlu0 %1228
    %v1231 = vadd.f32 %v893, %v1229
    %v1232 = vtanh.pop %v1231
    %v1233 = vsub.f32 1.0, %v1221
    %1235 = vrot.lane.b32.xlu0 %v1232, 96
    %v1236 = vpop.permute.xlu0 %1235
    %v1238 = vmul.f32 %v1233, %v1236
    %v1240 = vmul.f32 %v1221, %v1177
    %v1241 = vadd.f32 %v1238, %v1240
    %1243 = vrot.lane.b32.xlu0 %v1241, 96
    %v1244 = vpop.permute.xlu0 %1243
    %v1245 = vsel %vm279, %v1244, 0
    %1247 = vmatpush.msra.mxu0 0.0
    %1248 = vmatpush.msra.mxu0 0.0
    %1249 = vmatpush.msra.mxu0 0.0
    %1250 = vmatpush.msra.mxu0 0.0
    %1251 = vmatpush.msra.mxu0 0.0
    %1252 = vmatpush.msra.mxu0 0.0
    %1253 = vmatpush.msra.mxu0 0.0
    %1254 = vmatpush.msra.mxu0 0.0
    %1255 = vmatpush.msra.mxu0 0.0
    %1256 = vmatpush.msra.mxu0 0.0
    %1257 = vmatpush.msra.mxu0 0.0
    %1258 = vmatpush.msra.mxu0 0.0
    %1259 = vmatpush.msra.mxu0 %v898
    %1260 = vmatpush.msra.mxu0 %v897
    %1261 = vmatpush.msra.mxu0 %v896
    %1262 = vmatpush.msra.mxu0 %v895
    %1263 = vmatmul.f32.gmra.mxu0 %v1245
    %v1264 = vpop.f32.mrf.mxu0
    %v1265 = vadd.f32 %v903, %v1264
    %1266 = vdwg.mxu0
    %v1268 = vrot.slane %v1265, 6
    %v1270 = vadd.f32 %v893, %v1268
    %v1271 = vxor.u32 %v1270, 2147483648
    %v1272 = vmul.f32 %v1271, 1.442695
    %v1273 = vpow.pop %v1272
    %v1274 = vadd.f32 %v1273, 1.0
    %v1275 = vrcp.pop %v1274
    %v1276 = vmul.f32 %v1274, %v1275
    %v1277 = vsub.f32 1.0, %v1276
    %v1278 = vmul.f32 %v1275, %v1277
    %v1279 = vadd.f32 %v1275, %v1278
    %vm1280 = vweird.f32 %v1274
    %vm1281 = vweird.f32 %v1275
    %vm1282 = vmor %vm1280, %vm1281
    %v1283 = vsel %vm1282, %v1275, %v1279
    %v1284 = vand.u32 2147483647, %v1274
    %vm1285 = vcmp.eq.f32.partialorder %v1284, 8.507059e+37
    %v1286 = vand.u32 %v1274, 2147483648
    %v1287 = vor.u32 1.1754944e-38, %v1286
    %v1288 = vsel %vm1285, %v1287, %v1283
    %v1289 = vmul.f32 1.0, %v1288
    %1290 = vrot.lane.b32.xlu0 %v1268, 64
    %v1291 = vpop.permute.xlu0 %1290
    %v1293 = vmul.f32 %v1289, %v1291
    %1295 = vrot.lane.b32.xlu0 %v1293, 64
    %v1296 = vpop.permute.xlu0 %1295
    %v1298 = vadd.f32 %v893, %v1296
    %v1299 = vtanh.pop %v1298
    %v1300 = vsub.f32 1.0, %v1289
    %1302 = vrot.lane.b32.xlu0 %v1299, 96
    %v1303 = vpop.permute.xlu0 %1302
    %v1305 = vmul.f32 %v1300, %v1303
    %v1306 = vrot.slane %v1241, 6
    %v1308 = vmul.f32 %v1289, %v1306
    %v1309 = vadd.f32 %v1305, %v1308
    %v1311 = vrot.slane %v1309, 2
    %1312 = vrot.lane.b32.xlu0 %v1311, 96
    %v1313 = vpop.permute.xlu0 %1312
    %v1314 = vsel %vm279, %v1313, 0
    %1316 = vmatpush.msra.mxu0 0.0
    %1317 = vmatpush.msra.mxu0 0.0
    %1318 = vmatpush.msra.mxu0 0.0
    %1319 = vmatpush.msra.mxu0 0.0
    %1320 = vmatpush.msra.mxu0 0.0
    %1321 = vmatpush.msra.mxu0 0.0
    %1322 = vmatpush.msra.mxu0 0.0
    %1323 = vmatpush.msra.mxu0 0.0
    %1324 = vmatpush.msra.mxu0 0.0
    %1325 = vmatpush.msra.mxu0 0.0
    %1326 = vmatpush.msra.mxu0 0.0
    %1327 = vmatpush.msra.mxu0 0.0
    %1328 = vmatpush.msra.mxu0 %v898
    %1329 = vmatpush.msra.mxu0 %v897
    %1330 = vmatpush.msra.mxu0 %v896
    %1331 = vmatpush.msra.mxu0 %v895
    %1332 = vmatmul.f32.gmra.mxu0 %v1314
    %v1333 = vpop.f32.mrf.mxu0
    %v1334 = vadd.f32 %v903, %v1333
    %1335 = vdwg.mxu0
    %v1337 = vrot.slane %v1334, 4
    %v1339 = vadd.f32 %v893, %v1337
    %v1340 = vxor.u32 %v1339, 2147483648
    %v1341 = vmul.f32 %v1340, 1.442695
    %v1342 = vpow.pop %v1341
    %v1343 = vadd.f32 %v1342, 1.0
    %v1344 = vrcp.pop %v1343
    %v1345 = vmul.f32 %v1343, %v1344
    %v1346 = vsub.f32 1.0, %v1345
    %v1347 = vmul.f32 %v1344, %v1346
    %v1348 = vadd.f32 %v1344, %v1347
    %vm1349 = vweird.f32 %v1343
    %vm1350 = vweird.f32 %v1344
    %vm1351 = vmor %vm1349, %vm1350
    %v1352 = vsel %vm1351, %v1344, %v1348
    %v1353 = vand.u32 2147483647, %v1343
    %vm1354 = vcmp.eq.f32.partialorder %v1353, 8.507059e+37
    %v1355 = vand.u32 %v1343, 2147483648
    %v1356 = vor.u32 1.1754944e-38, %v1355
    %v1357 = vsel %vm1354, %v1356, %v1352
    %v1358 = vmul.f32 1.0, %v1357
    %1359 = vrot.lane.b32.xlu0 %v1337, 64
    %v1360 = vpop.permute.xlu0 %1359
    %v1362 = vmul.f32 %v1358, %v1360
    %1364 = vrot.lane.b32.xlu0 %v1362, 64
    %v1365 = vpop.permute.xlu0 %1364
    %v1367 = vadd.f32 %v893, %v1365
    %v1368 = vtanh.pop %v1367
    %v1369 = vsub.f32 1.0, %v1358
    %1371 = vrot.lane.b32.xlu0 %v1368, 96
    %v1372 = vpop.permute.xlu0 %1371
    %v1374 = vmul.f32 %v1369, %v1372
    %v1375 = vrot.slane %v1309, 6
    %v1377 = vmul.f32 %v1358, %v1375
    %v1378 = vadd.f32 %v1374, %v1377
    %v1380 = vrot.slane %v1378, 4
    %1381 = vrot.lane.b32.xlu0 %v1380, 96
    %v1382 = vpop.permute.xlu0 %1381
    %v1383 = vsel %vm279, %v1382, 0
    %1385 = vmatpush.msra.mxu0 0.0
    %1386 = vmatpush.msra.mxu0 0.0
    %1387 = vmatpush.msra.mxu0 0.0
    %1388 = vmatpush.msra.mxu0 0.0
    %1389 = vmatpush.msra.mxu0 0.0
    %1390 = vmatpush.msra.mxu0 0.0
    %1391 = vmatpush.msra.mxu0 0.0
    %1392 = vmatpush.msra.mxu0 0.0
    %1393 = vmatpush.msra.mxu0 0.0
    %1394 = vmatpush.msra.mxu0 0.0
    %1395 = vmatpush.msra.mxu0 0.0
    %1396 = vmatpush.msra.mxu0 0.0
    %1397 = vmatpush.msra.mxu0 %v898
    %1398 = vmatpush.msra.mxu0 %v897
    %1399 = vmatpush.msra.mxu0 %v896
    %1400 = vmatpush.msra.mxu0 %v895
    %1401 = vmatmul.f32.gmra.mxu0 %v1383
    %v1402 = vpop.f32.mrf.mxu0
    %v1403 = vadd.f32 %v903, %v1402
    %1404 = vdwg.mxu0
    %v1406 = vrot.slane %v1403, 2
    %v1408 = vadd.f32 %v893, %v1406
    %v1409 = vxor.u32 %v1408, 2147483648
    %v1410 = vmul.f32 %v1409, 1.442695
    %v1411 = vpow.pop %v1410
    %v1412 = vadd.f32 %v1411, 1.0
    %v1413 = vrcp.pop %v1412
    %v1414 = vmul.f32 %v1412, %v1413
    %v1415 = vsub.f32 1.0, %v1414
    %v1416 = vmul.f32 %v1413, %v1415
    %v1417 = vadd.f32 %v1413, %v1416
    %vm1418 = vweird.f32 %v1412
    %vm1419 = vweird.f32 %v1413
    %vm1420 = vmor %vm1418, %vm1419
    %v1421 = vsel %vm1420, %v1413, %v1417
    %v1422 = vand.u32 2147483647, %v1412
    %vm1423 = vcmp.eq.f32.partialorder %v1422, 8.507059e+37
    %v1424 = vand.u32 %v1412, 2147483648
    %v1425 = vor.u32 1.1754944e-38, %v1424
    %v1426 = vsel %vm1423, %v1425, %v1421
    %v1427 = vmul.f32 1.0, %v1426
    %1428 = vrot.lane.b32.xlu0 %v1406, 64
    %v1429 = vpop.permute.xlu0 %1428
    %v1431 = vmul.f32 %v1427, %v1429
    %1433 = vrot.lane.b32.xlu0 %v1431, 64
    %v1434 = vpop.permute.xlu0 %1433
    %v1436 = vadd.f32 %v893, %v1434
    %v1437 = vtanh.pop %v1436
    %v1438 = vsub.f32 1.0, %v1427
    %1440 = vrot.lane.b32.xlu0 %v1437, 96
    %v1441 = vpop.permute.xlu0 %1440
    %v1443 = vmul.f32 %v1438, %v1441
    %v1444 = vrot.slane %v1378, 6
    %v1446 = vmul.f32 %v1427, %v1444
    %v1447 = vadd.f32 %v1443, %v1446
    %v1448 = vld [vmem:[#allocation15] sm:$0x1]
    %v1449 = vld [vmem:[#allocation14] sm:$0xff]
    %v1450 = vld [vmem:[#allocation14 + $0x8] sm:$0xff]
    %v1451 = vld [vmem:[#allocation14 + $0x10] sm:$0xff]
    %v1452 = vld [vmem:[#allocation14 + $0x18] sm:$0xff]
    %v1453 = vrot.slane %v850, 6
    %1454 = vrot.lane.b32.xlu0 %v1453, 96
    %v1455 = vpop.permute.xlu0 %1454
    %v1456 = vsel %vm279, %v1455, 0
    %1458 = vmatpush.msra.mxu0 0.0
    %1459 = vmatpush.msra.mxu0 0.0
    %1460 = vmatpush.msra.mxu0 0.0
    %1461 = vmatpush.msra.mxu0 0.0
    %1462 = vmatpush.msra.mxu0 0.0
    %1463 = vmatpush.msra.mxu0 0.0
    %1464 = vmatpush.msra.mxu0 0.0
    %1465 = vmatpush.msra.mxu0 0.0
    %1466 = vmatpush.msra.mxu0 0.0
    %1467 = vmatpush.msra.mxu0 0.0
    %1468 = vmatpush.msra.mxu0 0.0
    %1469 = vmatpush.msra.mxu0 0.0
    %1470 = vmatpush.msra.mxu0 %v1452
    %1471 = vmatpush.msra.mxu0 %v1451
    %1472 = vmatpush.msra.mxu0 %v1450
    %1473 = vmatpush.msra.mxu0 %v1449
    %1474 = vmatmul.f32.gmra.mxu0 %v1456
    %v1475 = vpop.f32.mrf.mxu0
    %v1476 = vadd.f32 0.0, %v1475
    %1477 = vdwg.mxu0
    %v1479 = vperm.slane %v1448, 0
    %v1481 = vadd.f32 %v1479, %v1476
    %s1482 = scalar_lea.vmem [#allocation14], 32
    %v1483 = vld [vmem:[%s1482] sm:$0xff]
    %v1484 = vld [vmem:[%s1482 + $0x8] sm:$0xff]
    %v1485 = vld [vmem:[%s1482 + $0x10] sm:$0xff]
    %v1486 = vld [vmem:[%s1482 + $0x18] sm:$0xff]
    %v1488 = vrot.slane %v1447, 6
    %1489 = vrot.lane.b32.xlu0 %v1488, 96
    %v1490 = vpop.permute.xlu0 %1489
    %v1491 = vsel %vm279, %v1490, 0
    %1493 = vmatpush.msra.mxu0 0.0
    %1494 = vmatpush.msra.mxu0 0.0
    %1495 = vmatpush.msra.mxu0 0.0
    %1496 = vmatpush.msra.mxu0 0.0
    %1497 = vmatpush.msra.mxu0 0.0
    %1498 = vmatpush.msra.mxu0 0.0
    %1499 = vmatpush.msra.mxu0 0.0
    %1500 = vmatpush.msra.mxu0 0.0
    %1501 = vmatpush.msra.mxu0 0.0
    %1502 = vmatpush.msra.mxu0 0.0
    %1503 = vmatpush.msra.mxu0 0.0
    %1504 = vmatpush.msra.mxu0 0.0
    %1505 = vmatpush.msra.mxu0 %v1486
    %1506 = vmatpush.msra.mxu0 %v1485
    %1507 = vmatpush.msra.mxu0 %v1484
    %1508 = vmatpush.msra.mxu0 %v1483
    %1509 = vmatmul.f32.gmra.mxu0 %v1491
    %v1510 = vpop.f32.mrf.mxu0
    %v1511 = vadd.f32 0.0, %v1510
    %1512 = vdwg.mxu0
    %v1513 = vadd.f32 %v1481, %v1511
    %v1514 = vld [vmem:[#allocation17] sm:$0xff]
    %v1515 = vld [vmem:[#allocation17 + $0x8] sm:$0xff]
    %v1516 = vld [vmem:[#allocation17 + $0x10] sm:$0xff]
    %v1517 = vld [vmem:[#allocation17 + $0x18] sm:$0xff]
    %v1518 = vld [vmem:[#allocation18] sm:$0x1]
    %v1520 = vperm.slane %v1518, 0
    %v1523 = vsel %vm279, %v1513, 0
    %1525 = vmatpush.msra.mxu0 0.0
    %1526 = vmatpush.msra.mxu0 0.0
    %1527 = vmatpush.msra.mxu0 0.0
    %1528 = vmatpush.msra.mxu0 0.0
    %1529 = vmatpush.msra.mxu0 0.0
    %1530 = vmatpush.msra.mxu0 0.0
    %1531 = vmatpush.msra.mxu0 0.0
    %1532 = vmatpush.msra.mxu0 0.0
    %1533 = vmatpush.msra.mxu0 0.0
    %1534 = vmatpush.msra.mxu0 0.0
    %1535 = vmatpush.msra.mxu0 0.0
    %1536 = vmatpush.msra.mxu0 0.0
    %1537 = vmatpush.msra.mxu0 %v1517
    %1538 = vmatpush.msra.mxu0 %v1516
    %1539 = vmatpush.msra.mxu0 %v1515
    %1540 = vmatpush.msra.mxu0 %v1514
    %1541 = vmatmul.f32.gmra.mxu0 %v1523
    %v1542 = vpop.f32.mrf.mxu0
    %v1543 = vadd.f32 %v1520, %v1542
    %1544 = vdwg.mxu0
    %1546 = vrot.lane.b32.xlu0 %v1543, 96
    %v1547 = vpop.permute.xlu0 %1546
    %1549 = vxpose.xlu0.b32.start [1/16] %v1547, 128
    %1550 = vxpose.xlu0.b32.cont [2/16] 0.0, 128
    %1551 = vxpose.xlu0.b32.cont [3/16] 0.0, 128
    %1552 = vxpose.xlu0.b32.cont [4/16] 0.0, 128
    %1553 = vxpose.xlu0.b32.cont [5/16] 0.0, 128
    %1554 = vxpose.xlu0.b32.cont [6/16] 0.0, 128
    %1555 = vxpose.xlu0.b32.cont [7/16] 0.0, 128
    %1556 = vxpose.xlu0.b32.cont [8/16] 0.0, 128
    %1557 = vxpose.xlu0.b32.cont [9/16] 0.0, 128
    %1558 = vxpose.xlu0.b32.cont [10/16] 0.0, 128
    %1559 = vxpose.xlu0.b32.cont [11/16] 0.0, 128
    %1560 = vxpose.xlu0.b32.cont [12/16] 0.0, 128
    %1561 = vxpose.xlu0.b32.cont [13/16] 0.0, 128
    %1562 = vxpose.xlu0.b32.cont [14/16] 0.0, 128
    %1563 = vxpose.xlu0.b32.cont [15/16] 0.0, 128
    %1564 = vxpose.xlu0.b32.end [16/16] 0.0, 128
    %v1565 = vpop.trf.xlu0
    %v1566 = vpop.trf.xlu0
    %v1567 = vpop.trf.xlu0
    %v1568 = vpop.trf.xlu0
    %v1569 = vpop.trf.xlu0
    %v1570 = vpop.trf.xlu0
    %v1571 = vpop.trf.xlu0
    %v1572 = vpop.trf.xlu0
    %v1573 = vpop.trf.xlu0
    %v1574 = vpop.trf.xlu0
    %v1575 = vpop.trf.xlu0
    %v1576 = vpop.trf.xlu0
    %v1577 = vpop.trf.xlu0
    %v1578 = vpop.trf.xlu0
    %v1579 = vpop.trf.xlu0
    %v1580 = vpop.trf.xlu0
    %vm1581 = vcmask 15360
    %v1583 = vsel %vm1581, %v1565, 0
    %v1586 = vsel %vm1581, %v1566, 0
    %v1589 = vsel %vm1581, %v1567, 0
    %v1592 = vsel %vm1581, %v1568, 0
    %vm1594 = vcmask 1041408
    %v1595 = vsel %vm1594, %v1543, 0
    %1597 = vmatpush.msra.mxu0 0.0
    %1598 = vmatpush.msra.mxu0 0.0
    %1599 = vmatpush.msra.mxu0 0.0
    %1600 = vmatpush.msra.mxu0 0.0
    %1601 = vmatpush.msra.mxu0 0.0
    %1602 = vmatpush.msra.mxu0 0.0
    %1603 = vmatpush.msra.mxu0 0.0
    %1604 = vmatpush.msra.mxu0 0.0
    %1605 = vmatpush.msra.mxu0 0.0
    %1606 = vmatpush.msra.mxu0 0.0
    %1607 = vmatpush.msra.mxu0 0.0
    %1608 = vmatpush.msra.mxu0 0.0
    %1609 = vmatpush.msra.mxu0 0.0
    %1610 = vmatpush.msra.mxu0 0.0
    %1611 = vmatpush.msra.mxu0 0.0
    %1612 = vmatpush.msra.mxu0 %v1595
    %1613 = vmatmul.f32.gmra.mxu0 %v1583
    %v1614 = vpop.f32.mrf.mxu0
    %v1615 = vadd.f32 0.0, %v1614
    %1616 = vmatmul.f32.gmra.mxu0 %v1586
    %v1617 = vpop.f32.mrf.mxu0
    %v1618 = vadd.f32 0.0, %v1617
    %1619 = vmatmul.f32.gmra.mxu0 %v1589
    %v1620 = vpop.f32.mrf.mxu0
    %v1621 = vadd.f32 0.0, %v1620
    %1622 = vmatmul.f32.gmra.mxu0 %v1592
    %v1623 = vpop.f32.mrf.mxu0
    %v1624 = vadd.f32 0.0, %v1623
    %1625 = vdwg.mxu0
    %v1626 = vmul.f32 %v1615, 0.17677669
    %v1627 = vmul.f32 %v1618, 0.17677669
    %v1628 = vmul.f32 %v1621, 0.17677669
    %v1629 = vmul.f32 %v1624, 0.17677669
    %v1630 = vsel %vm279, %v1626, -inf
    %1631 = vmax.xlane.f32.xlu0 %v1630
    %v1632 = vpop.xlane.xlu0 %1631
    %v1633 = vsel %vm279, %v1627, -inf
    %1634 = vmax.xlane.f32.xlu0 %v1633
    %v1635 = vpop.xlane.xlu0 %1634
    %v1636 = vsel %vm279, %v1628, -inf
    %1637 = vmax.xlane.f32.xlu0 %v1636
    %v1638 = vpop.xlane.xlu0 %1637
    %v1639 = vsel %vm279, %v1629, -inf
    %1640 = vmax.xlane.f32.xlu0 %v1639
    %v1641 = vpop.xlane.xlu0 %1640
    %v1642 = vsub.f32 %v1626, %v1632
    %v1643 = vsub.f32 %v1627, %v1635
    %v1644 = vsub.f32 %v1628, %v1638
    %v1645 = vsub.f32 %v1629, %v1641
    %v1646 = vmul.f32 %v1642, 1.442695
    %v1647 = vpow.pop %v1646
    %v1648 = vmul.f32 %v1643, 1.442695
    %v1649 = vpow.pop %v1648
    %v1650 = vmul.f32 %v1644, 1.442695
    %v1651 = vpow.pop %v1650
    %v1652 = vmul.f32 %v1645, 1.442695
    %v1653 = vpow.pop %v1652
    %v1654 = vsel %vm279, %v1647, 0.0
    %1655 = vadd.xlane.f32.xlu0 %v1654
    %v1656 = vpop.xlane.xlu0 %1655
    %v1657 = vsel %vm279, %v1649, 0.0
    %1658 = vadd.xlane.f32.xlu0 %v1657
    %v1659 = vpop.xlane.xlu0 %1658
    %v1660 = vsel %vm279, %v1651, 0.0
    %1661 = vadd.xlane.f32.xlu0 %v1660
    %v1662 = vpop.xlane.xlu0 %1661
    %v1663 = vsel %vm279, %v1653, 0.0
    %1664 = vadd.xlane.f32.xlu0 %v1663
    %v1665 = vpop.xlane.xlu0 %1664
    %v1666 = vrcp.pop %v1656
    %v1667 = vmul.f32 %v1656, %v1666
    %v1668 = vsub.f32 1.0, %v1667
    %v1669 = vmul.f32 %v1666, %v1668
    %v1670 = vadd.f32 %v1666, %v1669
    %vm1671 = vweird.f32 %v1656
    %vm1672 = vweird.f32 %v1666
    %vm1673 = vmor %vm1671, %vm1672
    %v1674 = vsel %vm1673, %v1666, %v1670
    %v1675 = vand.u32 2147483647, %v1656
    %vm1676 = vcmp.eq.f32.partialorder %v1675, 8.507059e+37
    %v1677 = vand.u32 %v1656, 2147483648
    %v1678 = vor.u32 1.1754944e-38, %v1677
    %v1679 = vsel %vm1676, %v1678, %v1674
    %v1680 = vmul.f32 %v1647, %v1679
    %v1681 = vrcp.pop %v1659
    %v1682 = vmul.f32 %v1659, %v1681
    %v1683 = vsub.f32 1.0, %v1682
    %v1684 = vmul.f32 %v1681, %v1683
    %v1685 = vadd.f32 %v1681, %v1684
    %vm1686 = vweird.f32 %v1659
    %vm1687 = vweird.f32 %v1681
    %vm1688 = vmor %vm1686, %vm1687
    %v1689 = vsel %vm1688, %v1681, %v1685
    %v1690 = vand.u32 2147483647, %v1659
    %vm1691 = vcmp.eq.f32.partialorder %v1690, 8.507059e+37
    %v1692 = vand.u32 %v1659, 2147483648
    %v1693 = vor.u32 1.1754944e-38, %v1692
    %v1694 = vsel %vm1691, %v1693, %v1689
    %v1695 = vmul.f32 %v1649, %v1694
    %v1696 = vrcp.pop %v1662
    %v1697 = vmul.f32 %v1662, %v1696
    %v1698 = vsub.f32 1.0, %v1697
    %v1699 = vmul.f32 %v1696, %v1698
    %v1700 = vadd.f32 %v1696, %v1699
    %vm1701 = vweird.f32 %v1662
    %vm1702 = vweird.f32 %v1696
    %vm1703 = vmor %vm1701, %vm1702
    %v1704 = vsel %vm1703, %v1696, %v1700
    %v1705 = vand.u32 2147483647, %v1662
    %vm1706 = vcmp.eq.f32.partialorder %v1705, 8.507059e+37
    %v1707 = vand.u32 %v1662, 2147483648
    %v1708 = vor.u32 1.1754944e-38, %v1707
    %v1709 = vsel %vm1706, %v1708, %v1704
    %v1710 = vmul.f32 %v1651, %v1709
    %v1711 = vrcp.pop %v1665
    %v1712 = vmul.f32 %v1665, %v1711
    %v1713 = vsub.f32 1.0, %v1712
    %v1714 = vmul.f32 %v1711, %v1713
    %v1715 = vadd.f32 %v1711, %v1714
    %vm1716 = vweird.f32 %v1665
    %vm1717 = vweird.f32 %v1711
    %vm1718 = vmor %vm1716, %vm1717
    %v1719 = vsel %vm1718, %v1711, %v1715
    %v1720 = vand.u32 2147483647, %v1665
    %vm1721 = vcmp.eq.f32.partialorder %v1720, 8.507059e+37
    %v1722 = vand.u32 %v1665, 2147483648
    %v1723 = vor.u32 1.1754944e-38, %v1722
    %v1724 = vsel %vm1721, %v1723, %v1719
    %v1725 = vmul.f32 %v1653, %v1724
    %1726 = vrot.lane.b32.xlu0 %v1543, 64
    %v1727 = vpop.permute.xlu0 %1726
    %v1728 = vsel %vm279, %v1727, 0
    %1730 = vmatpush.msra.mxu0 0.0
    %1731 = vmatpush.msra.mxu0 0.0
    %1732 = vmatpush.msra.mxu0 0.0
    %1733 = vmatpush.msra.mxu0 0.0
    %1734 = vmatpush.msra.mxu0 0.0
    %1735 = vmatpush.msra.mxu0 0.0
    %1736 = vmatpush.msra.mxu0 0.0
    %1737 = vmatpush.msra.mxu0 0.0
    %1738 = vmatpush.msra.mxu0 0.0
    %1739 = vmatpush.msra.mxu0 0.0
    %1740 = vmatpush.msra.mxu0 0.0
    %1741 = vmatpush.msra.mxu0 0.0
    %1742 = vmatpush.msra.mxu0 %v1725
    %1743 = vmatpush.msra.mxu0 %v1710
    %1744 = vmatpush.msra.mxu0 %v1695
    %1745 = vmatpush.msra.mxu0 %v1680
    %1746 = vmatmul.f32.gmra.mxu0 %v1728
    %v1747 = vpop.f32.mrf.mxu0
    %v1748 = vadd.f32 0.0, %v1747
    %1749 = vdwg.mxu0
    %v1750 = vld [vmem:[#allocation20] sm:$0xff]
    %v1751 = vld [vmem:[#allocation20 + $0x8] sm:$0xff]
    %v1752 = vld [vmem:[#allocation20 + $0x10] sm:$0xff]
    %v1753 = vld [vmem:[#allocation20 + $0x18] sm:$0xff]
    %v1754 = vld [vmem:[#allocation21] sm:$0x1]
    %v1756 = vperm.slane %v1754, 0
    %v1759 = vsel %vm279, %v1748, 0
    %1761 = vmatpush.msra.mxu0 0.0
    %1762 = vmatpush.msra.mxu0 0.0
    %1763 = vmatpush.msra.mxu0 0.0
    %1764 = vmatpush.msra.mxu0 0.0
    %1765 = vmatpush.msra.mxu0 0.0
    %1766 = vmatpush.msra.mxu0 0.0
    %1767 = vmatpush.msra.mxu0 0.0
    %1768 = vmatpush.msra.mxu0 0.0
    %1769 = vmatpush.msra.mxu0 0.0
    %1770 = vmatpush.msra.mxu0 0.0
    %1771 = vmatpush.msra.mxu0 0.0
    %1772 = vmatpush.msra.mxu0 0.0
    %1773 = vmatpush.msra.mxu0 %v1753
    %1774 = vmatpush.msra.mxu0 %v1752
    %1775 = vmatpush.msra.mxu0 %v1751
    %1776 = vmatpush.msra.mxu0 %v1750
    %1777 = vmatmul.f32.gmra.mxu0 %v1759
    %v1778 = vpop.f32.mrf.mxu0
    %v1779 = vadd.f32 %v1756, %v1778
    %1780 = vdwg.mxu0
    %1781 = vst.msk [vmem:[#allocation23] sm:$0x3] %vm349, %v1779
    // Predicated region
    $region114: #{energy_encoder_net_forward.1} parent=1 // pred_check
      _
    $region115: #{energy_encoder_net_forward.1} parent=1 // pred_check_branch
      %1783 = sbr.rel (0) target = $region117
    $region116: #{energy_encoder_net_forward.1} parent=1 // pred_region
      %1785 = vsyncadd [#allocation5], 0
      %s1787 = sshll.u32 [#allocation23], 4
      %s1788 = int_to_ptr.vmem [resolvable:$true] %s1787
      %s1789 = sshll.u32 %s16, 4
      %s1790 = int_to_ptr.hbm [resolvable:$true] %s1789
      %1792 = dma.vmem_to_hbm [thread:$0]  %s1788, 32, %s1790, [#allocation5]
    $region117: #{energy_encoder_net_forward.1} parent=1 // pred_fallthru
      _
    // Predicated region
    $region118: #{energy_encoder_net_forward.1} parent=1 // pred_check
      _
    $region119: #{energy_encoder_net_forward.1} parent=1 // pred_check_branch
      %1794 = sbr.rel (0) target = $region121
    $region120: #{energy_encoder_net_forward.1} parent=1 // pred_region
      %1796 = dma.done [#allocation5], 32
    $region121: #{energy_encoder_net_forward.1} parent=1 // pred_fallthru
      _
    %1797 = vsyncpa [#allocation4], 1
    %1798 = vsyncpa [#allocation7], 1
    %1799 = vsyncpa [#allocation10], 1
    %1800 = vsyncpa [#allocation13], 1
    %1801 = vsyncpa [#allocation16], 1
    %1802 = vsyncpa [#allocation19], 1
    %1803 = vsyncpa [#allocation22], 1
    %1804 = vsyncpa [#allocation5], 1

</llo_original>
